<compile_context>
chip_gen: v7x
topology: tpu7x:2x2x1
jax: 0.10.0
libtpu: 0.0.40
codegen_flags: <defaults>
</compile_context>

<pallas_src>
import functools

import jax
import jax.numpy as jnp
import numpy as np
from jax.experimental import pallas as pl
from jax.experimental.pallas import tpu as pltpu


def _vmem_limit(block_bytes):
    """Explicit VMEM budget derived from the block sizes (double-buffered +
    slack), clamped so it is safe on v5e/v6e (128 MiB) and v7x (64 MiB)."""
    return int(min(max(4 * block_bytes, 8 * 1024 * 1024), 64 * 1024 * 1024))


# ----------------------------------------------------------------------------
# Fused kernel: one batch element per grid step.
#   x block     : (1, S, Din)
#   w_qkv       : (Din, Dq+Dk+Dv)   (resident, constant index_map)
#   b_qkv       : (1, Dq+Dk+Dv)
#   w_o         : (H*Vd, Dout)
#   b_o         : (1, Dout)
#   outputs     : context (1, S, Dout),  attn (1, S, H*S)  [lane-dense]
#   scratch     : ctx (S, H*Vd) in VMEM
# ----------------------------------------------------------------------------
def _mhsa_kernel(x_ref, wqkv_ref, bqkv_ref, wo_ref, bo_ref,
                 out_ref, attn_ref, ctx_scratch, *,
                 num_heads, key_dim, value_dim, inv_temperature):
    x = x_ref[0]                                   # (S, Din)
    seq = x.shape[0]
    d_attn = num_heads * key_dim

    # Fused QKV projection for this batch element: one MXU matmul.
    qkv = (jnp.dot(x, wqkv_ref[...], preferred_element_type=jnp.float32)
           + bqkv_ref[...])                        # (S, 2*Dq + Dv)

    # Fold 1/temperature into Q once (cheaper than scaling the (S, S) scores).
    q_all = qkv[:, :d_attn] * inv_temperature      # (S, Dq)

    for h in range(num_heads):                     # static unroll over heads
        q_h = q_all[:, h * key_dim:(h + 1) * key_dim]                       # (S, Kd)
        k_h = qkv[:, d_attn + h * key_dim:d_attn + (h + 1) * key_dim]       # (S, Kd)
        v_h = qkv[:, 2 * d_attn + h * value_dim:
                  2 * d_attn + (h + 1) * value_dim]                         # (S, Vd)

        # Q @ K^T as a transposed contraction (no explicit K relayout).
        s = jax.lax.dot_general(
            q_h, k_h, dimension_numbers=(((1,), (1,)), ((), ())),
            preferred_element_type=jnp.float32)                             # (S, S)

        m = jnp.max(s, axis=-1, keepdims=True)
        e = jnp.exp(s - m)
        # Exact reciprocal (S values) then multiply: keeps attn within 1e-5.
        p = e * (1.0 / jnp.sum(e, axis=-1, keepdims=True))                  # (S, S)

        # Lane-dense slice stores: attn laid out as (S, H*S), ctx as (S, H*Vd).
        attn_ref[0, :, h * seq:(h + 1) * seq] = p
        ctx_scratch[:, h * value_dim:(h + 1) * value_dim] = jnp.dot(
            p, v_h, preferred_element_type=jnp.float32)

    # Fused output projection: one (S, H*Vd) @ (H*Vd, Dout) MXU matmul.
    out_ref[0] = (jnp.dot(ctx_scratch[...], wo_ref[...],
                          preferred_element_type=jnp.float32)
                  + bo_ref[...])


# ----------------------------------------------------------------------------
# Module wrapper — only free (contiguous) reshapes outside the kernel.
# ----------------------------------------------------------------------------
def multi_head_self_attention(x, params, num_heads, temperature=None):
    """Forward pass of MultiHeadSelfAttention.

    x: (B, S, input_dim)
    Returns:
        context: (B, S, output_dim)
        attn:    (B, S, num_heads, S)
    """
    B, S, input_dim = x.shape
    wq, bq = params["wq"], params["bq"]
    wk, bk = params["wk"], params["bk"]
    wv, bv = params["wv"], params["bv"]
    wo, bo = params["wo"], params["bo"]

    d_attn = wq.shape[1]
    d_val = wv.shape[1]
    out_dim = wo.shape[1]
    d_tot = 2 * d_attn + d_val
    key_dim = d_attn // num_heads
    value_dim = d_val // num_heads
    temp = float(temperature) if temperature is not None else float(key_dim) ** 0.5

    # Fused QKV weight so x is contracted against all three projections at once.
    w_qkv = jnp.concatenate([wq, wk, wv], axis=1).astype(jnp.float32)     # (Din, Dtot)
    b_qkv = jnp.concatenate([bq, bk, bv], axis=0).reshape(1, d_tot).astype(jnp.float32)
    wo_f = wo.astype(jnp.float32)
    bo_f = bo.reshape(1, out_dim).astype(jnp.float32)

    kernel = functools.partial(
        _mhsa_kernel, num_heads=num_heads, key_dim=key_dim,
        value_dim=value_dim, inv_temperature=float(1.0 / temp))

    block_bytes = 4 * (S * input_dim + input_dim * d_tot + d_tot
                       + d_val * out_dim + out_dim + S * out_dim
                       + S * num_heads * S + S * d_tot + 4 * S * S + S * d_val)

    context, attn_flat = pl.pallas_call(
        kernel,
        grid=(B,),
        out_shape=(
            jax.ShapeDtypeStruct((B, S, out_dim), jnp.float32),
            jax.ShapeDtypeStruct((B, S, num_heads * S), jnp.float32),
        ),
        in_specs=[
            pl.BlockSpec((1, S, input_dim), lambda b: (b, 0, 0)),
            pl.BlockSpec((input_dim, d_tot), lambda b: (0, 0)),   # resident weight
            pl.BlockSpec((1, d_tot), lambda b: (0, 0)),
            pl.BlockSpec((d_val, out_dim), lambda b: (0, 0)),     # resident weight
            pl.BlockSpec((1, out_dim), lambda b: (0, 0)),
        ],
        out_specs=(
            pl.BlockSpec((1, S, out_dim), lambda b: (b, 0, 0)),
            pl.BlockSpec((1, S, num_heads * S), lambda b: (b, 0, 0)),
        ),
        scratch_shapes=[pltpu.VMEM((S, d_val), jnp.float32)],
        compiler_params=pltpu.CompilerParams(
            dimension_semantics=("parallel",),
            vmem_limit_bytes=_vmem_limit(block_bytes),
        ),
    )(x.astype(jnp.float32), w_qkv, b_qkv, wo_f, bo_f)

    # (B, S, H*S) -> (B, S, H, S) is a contiguous (free) reshape.
    attn = attn_flat.reshape(B, S, num_heads, S)
    return context, attn


# ----------------------------------------------------------------------------
# Pure-JAX reference for validation
# ----------------------------------------------------------------------------
def _reference(x, params, num_heads, temperature=None):
    B, S, _ = x.shape
    d_attn = params["wk"].shape[1]
    d_val = params["wv"].shape[1]
    kd = d_attn // num_heads
    vd = d_val // num_heads
    temp = temperature if temperature is not None else float(kd) ** 0.5
    k = (x @ params["wk"] + params["bk"]).reshape(B, S, num_heads, kd).transpose(0, 2, 1, 3)
    v = (x @ params["wv"] + params["bv"]).reshape(B, S, num_heads, vd).transpose(0, 2, 1, 3)
    q = (x @ params["wq"] + params["bq"]).reshape(B, S, num_heads, kd).transpose(0, 2, 1, 3)
    s = jnp.einsum("bhqd,bhkd->bhqk", q, k) / temp
    p = jax.nn.softmax(s, axis=-1)
    ctx = jnp.einsum("bhqk,bhkd->bhqd", p, v).transpose(0, 2, 1, 3).reshape(B, S, -1)
    context = ctx @ params["wo"] + params["bo"]
    return context, p.transpose(0, 2, 1, 3)


if __name__ == "__main__":
    # Small config consistent with the module: self-attention over (B, S, D).
    batch, seq, input_dim = 2, 8, 32
    num_heads = 4
    total_attention_dim = 32
    total_value_dim = 32
    output_dim = input_dim

    key = jax.random.PRNGKey(0)
    ks = jax.random.split(key, 9)
    scale = 0.1
    params = {
        "wk": scale * jax.random.normal(ks[0], (input_dim, total_attention_dim), jnp.float32),
        "bk": scale * jax.random.normal(ks[1], (total_attention_dim,), jnp.float32),
        "wv": scale * jax.random.normal(ks[2], (input_dim, total_value_dim), jnp.float32),
        "bv": scale * jax.random.normal(ks[3], (total_value_dim,), jnp.float32),
        "wq": scale * jax.random.normal(ks[4], (input_dim, total_attention_dim), jnp.float32),
        "bq": scale * jax.random.normal(ks[5], (total_attention_dim,), jnp.float32),
        "wo": scale * jax.random.normal(ks[6], (total_value_dim, output_dim), jnp.float32),
        "bo": scale * jax.random.normal(ks[7], (output_dim,), jnp.float32),
    }
    x = jax.random.normal(ks[8], (batch, seq, input_dim), jnp.float32)

    context, attn = multi_head_self_attention(x, params, num_heads)
    context = jax.block_until_ready(context)
    attn = jax.block_until_ready(attn)

    assert context.shape == (batch, seq, output_dim)
    assert attn.shape == (batch, seq, num_heads, seq)

    ref_ctx, ref_attn = _reference(x, params, num_heads)
    np.testing.assert_allclose(np.asarray(context), np.asarray(ref_ctx), atol=1e-4, rtol=1e-4)
    np.testing.assert_allclose(np.asarray(attn), np.asarray(ref_attn), atol=1e-5, rtol=1e-4)

    print("KERNEL_OK")
</pallas_src>

<mosaic_0001>
module attributes {stable_mosaic.version = 11 : i64} {
  func.func @_mhsa_kernel(%arg0: i32, %arg1: memref<1x8x32xf32, #tpu.memory_space<vmem>>, %arg2: memref<32x96xf32, #tpu.memory_space<vmem>>, %arg3: memref<1x96xf32, #tpu.memory_space<vmem>>, %arg4: memref<32x32xf32, #tpu.memory_space<vmem>>, %arg5: memref<1x32xf32, #tpu.memory_space<vmem>>, %arg6: memref<1x8x32xf32, #tpu.memory_space<vmem>>, %arg7: memref<1x8x32xf32, #tpu.memory_space<vmem>>, %arg8: memref<8x32xf32, #tpu.memory_space<vmem>>) attributes {dimension_semantics = [#tpu.dimension_semantics<parallel>], iteration_bounds = array<i64: 2>, scalar_prefetch = 0 : i64, scratch_operands = 1 : i64, tpu.core_type = #tpu.core_type<tc>, window_params = [{transform_indices = @transform_0, window_bounds = array<i64: 1, 8, 32>}, {pipeline_mode = #tpu.pipeline_mode<synchronous>, transform_indices = @transform_1, window_bounds = array<i64: 32, 96>}, {pipeline_mode = #tpu.pipeline_mode<synchronous>, transform_indices = @transform_2, window_bounds = array<i64: 1, 96>}, {pipeline_mode = #tpu.pipeline_mode<synchronous>, transform_indices = @transform_3, window_bounds = array<i64: 32, 32>}, {pipeline_mode = #tpu.pipeline_mode<synchronous>, transform_indices = @transform_4, window_bounds = array<i64: 1, 32>}, {transform_indices = @transform_5, window_bounds = array<i64: 1, 8, 32>}, {transform_indices = @transform_6, window_bounds = array<i64: 1, 8, 32>}]} {
    %c0 = arith.constant 0 : index
    %c0_0 = arith.constant 0 : index
    %c0_1 = arith.constant 0 : index
    %0 = vector.load %arg1[%c0, %c0_0, %c0_1] : memref<1x8x32xf32, #tpu.memory_space<vmem>>, vector<1x8x32xf32>
    %1 = vector.shape_cast %0 : vector<1x8x32xf32> to vector<8x32xf32>
    %c0_2 = arith.constant 0 : index
    %c0_3 = arith.constant 0 : index
    %2 = vector.load %arg2[%c0_2, %c0_3] : memref<32x96xf32, #tpu.memory_space<vmem>>, vector<32x96xf32>
    %cst = arith.constant dense<0.000000e+00> : vector<8x96xf32>
    %3 = tpu.matmul %1, %2, %cst {dimension_numbers = #tpu.dot_dimension_numbers<[1], [0], [0], [1], [0, 0, 1, 1], [], []>} : vector<8x32xf32>, vector<32x96xf32>, vector<8x96xf32> -> vector<8x96xf32>
    %c0_4 = arith.constant 0 : index
    %c0_5 = arith.constant 0 : index
    %4 = vector.load %arg3[%c0_4, %c0_5] : memref<1x96xf32, #tpu.memory_space<vmem>>, vector<1x96xf32>
    %5 = vector.broadcast %4 : vector<1x96xf32> to vector<8x96xf32>
    %6 = arith.addf %3, %5 : vector<8x96xf32>
    %7 = vector.extract_strided_slice %6 {offsets = [0, 0], sizes = [8, 32], strides = [1, 1]} : vector<8x96xf32> to vector<8x32xf32>
    %cst_6 = arith.constant 0.353553385 : f32
    %8 = vector.broadcast %cst_6 : f32 to vector<8x32xf32>
    %9 = arith.mulf %7, %8 : vector<8x32xf32>
    %10 = vector.extract_strided_slice %9 {offsets = [0, 0], sizes = [8, 8], strides = [1, 1]} : vector<8x32xf32> to vector<8x8xf32>
    %11 = vector.extract_strided_slice %6 {offsets = [0, 32], sizes = [8, 8], strides = [1, 1]} : vector<8x96xf32> to vector<8x8xf32>
    %12 = vector.extract_strided_slice %6 {offsets = [0, 64], sizes = [8, 8], strides = [1, 1]} : vector<8x96xf32> to vector<8x8xf32>
    %cst_7 = arith.constant dense<0.000000e+00> : vector<8x8xf32>
    %13 = tpu.matmul %10, %11, %cst_7 {dimension_numbers = #tpu.dot_dimension_numbers<[1], [1], [0], [0], [0, 0, 1, 0], [], []>} : vector<8x8xf32>, vector<8x8xf32>, vector<8x8xf32> -> vector<8x8xf32>
    %cst_8 = arith.constant dense<0xFF800000> : vector<8xf32>
    %14 = vector.multi_reduction <maximumf>, %13, %cst_8 [1] : vector<8x8xf32> to vector<8xf32>
    %15 = vector.shape_cast %14 : vector<8xf32> to vector<8x1xf32>
    %16 = vector.broadcast %15 : vector<8x1xf32> to vector<8x8xf32>
    %17 = arith.subf %13, %16 : vector<8x8xf32>
    %18 = math.exp %17 : vector<8x8xf32>
    %cst_9 = arith.constant dense<0.000000e+00> : vector<8xf32>
    %19 = vector.multi_reduction <add>, %18, %cst_9 [1] : vector<8x8xf32> to vector<8xf32>
    %20 = vector.shape_cast %19 : vector<8xf32> to vector<8x1xf32>
    %cst_10 = arith.constant 1.000000e+00 : f32
    %21 = vector.broadcast %cst_10 : f32 to vector<8x1xf32>
    %22 = arith.divf %21, %20 : vector<8x1xf32>
    %23 = vector.broadcast %22 : vector<8x1xf32> to vector<8x8xf32>
    %24 = arith.mulf %18, %23 : vector<8x8xf32>
    %c0_11 = arith.constant 0 : index
    %c0_12 = arith.constant 0 : index
    %c0_13 = arith.constant 0 : index
    %25 = vector.load %arg7[%c0_11, %c0_12, %c0_13] : memref<1x8x32xf32, #tpu.memory_space<vmem>>, vector<1x8x8xf32>
    %26 = vector.shape_cast %25 : vector<1x8x8xf32> to vector<8x8xf32>
    %27 = vector.shape_cast %24 : vector<8x8xf32> to vector<1x8x8xf32>
    tpu.vector_store %arg7[%c0_11, %c0_12, %c0_13], %27 {strides = array<i32>} : memref<1x8x32xf32, #tpu.memory_space<vmem>>, vector<1x8x8xf32>,
    %cst_14 = arith.constant dense<0.000000e+00> : vector<8x8xf32>
    %28 = tpu.matmul %24, %12, %cst_14 {dimension_numbers = #tpu.dot_dimension_numbers<[1], [0], [0], [1], [0, 0, 1, 1], [], []>} : vector<8x8xf32>, vector<8x8xf32>, vector<8x8xf32> -> vector<8x8xf32>
    %c0_15 = arith.constant 0 : index
    %c0_16 = arith.constant 0 : index
    %29 = vector.load %arg8[%c0_15, %c0_16] : memref<8x32xf32, #tpu.memory_space<vmem>>, vector<8x8xf32>
    tpu.vector_store %arg8[%c0_15, %c0_16], %28 {strides = array<i32>} : memref<8x32xf32, #tpu.memory_space<vmem>>, vector<8x8xf32>,
    %30 = vector.extract_strided_slice %9 {offsets = [0, 8], sizes = [8, 8], strides = [1, 1]} : vector<8x32xf32> to vector<8x8xf32>
    %31 = vector.extract_strided_slice %6 {offsets = [0, 40], sizes = [8, 8], strides = [1, 1]} : vector<8x96xf32> to vector<8x8xf32>
    %32 = vector.extract_strided_slice %6 {offsets = [0, 72], sizes = [8, 8], strides = [1, 1]} : vector<8x96xf32> to vector<8x8xf32>
    %cst_17 = arith.constant dense<0.000000e+00> : vector<8x8xf32>
    %33 = tpu.matmul %30, %31, %cst_17 {dimension_numbers = #tpu.dot_dimension_numbers<[1], [1], [0], [0], [0, 0, 1, 0], [], []>} : vector<8x8xf32>, vector<8x8xf32>, vector<8x8xf32> -> vector<8x8xf32>
    %cst_18 = arith.constant dense<0xFF800000> : vector<8xf32>
    %34 = vector.multi_reduction <maximumf>, %33, %cst_18 [1] : vector<8x8xf32> to vector<8xf32>
    %35 = vector.shape_cast %34 : vector<8xf32> to vector<8x1xf32>
    %36 = vector.broadcast %35 : vector<8x1xf32> to vector<8x8xf32>
    %37 = arith.subf %33, %36 : vector<8x8xf32>
    %38 = math.exp %37 : vector<8x8xf32>
    %cst_19 = arith.constant dense<0.000000e+00> : vector<8xf32>
    %39 = vector.multi_reduction <add>, %38, %cst_19 [1] : vector<8x8xf32> to vector<8xf32>
    %40 = vector.shape_cast %39 : vector<8xf32> to vector<8x1xf32>
    %cst_20 = arith.constant 1.000000e+00 : f32
    %41 = vector.broadcast %cst_20 : f32 to vector<8x1xf32>
    %42 = arith.divf %41, %40 : vector<8x1xf32>
    %43 = vector.broadcast %42 : vector<8x1xf32> to vector<8x8xf32>
    %44 = arith.mulf %38, %43 : vector<8x8xf32>
    %c0_21 = arith.constant 0 : index
    %c0_22 = arith.constant 0 : index
    %c8 = arith.constant 8 : index
    %45 = vector.load %arg7[%c0_21, %c0_22, %c8] : memref<1x8x32xf32, #tpu.memory_space<vmem>>, vector<1x8x8xf32>
    %46 = vector.shape_cast %45 : vector<1x8x8xf32> to vector<8x8xf32>
    %47 = vector.shape_cast %44 : vector<8x8xf32> to vector<1x8x8xf32>
    tpu.vector_store %arg7[%c0_21, %c0_22, %c8], %47 {strides = array<i32>} : memref<1x8x32xf32, #tpu.memory_space<vmem>>, vector<1x8x8xf32>,
    %cst_23 = arith.constant dense<0.000000e+00> : vector<8x8xf32>
    %48 = tpu.matmul %44, %32, %cst_23 {dimension_numbers = #tpu.dot_dimension_numbers<[1], [0], [0], [1], [0, 0, 1, 1], [], []>} : vector<8x8xf32>, vector<8x8xf32>, vector<8x8xf32> -> vector<8x8xf32>
    %c0_24 = arith.constant 0 : index
    %c8_25 = arith.constant 8 : index
    %49 = vector.load %arg8[%c0_24, %c8_25] : memref<8x32xf32, #tpu.memory_space<vmem>>, vector<8x8xf32>
    tpu.vector_store %arg8[%c0_24, %c8_25], %48 {strides = array<i32>} : memref<8x32xf32, #tpu.memory_space<vmem>>, vector<8x8xf32>,
    %50 = vector.extract_strided_slice %9 {offsets = [0, 16], sizes = [8, 8], strides = [1, 1]} : vector<8x32xf32> to vector<8x8xf32>
    %51 = vector.extract_strided_slice %6 {offsets = [0, 48], sizes = [8, 8], strides = [1, 1]} : vector<8x96xf32> to vector<8x8xf32>
    %52 = vector.extract_strided_slice %6 {offsets = [0, 80], sizes = [8, 8], strides = [1, 1]} : vector<8x96xf32> to vector<8x8xf32>
    %cst_26 = arith.constant dense<0.000000e+00> : vector<8x8xf32>
    %53 = tpu.matmul %50, %51, %cst_26 {dimension_numbers = #tpu.dot_dimension_numbers<[1], [1], [0], [0], [0, 0, 1, 0], [], []>} : vector<8x8xf32>, vector<8x8xf32>, vector<8x8xf32> -> vector<8x8xf32>
    %cst_27 = arith.constant dense<0xFF800000> : vector<8xf32>
    %54 = vector.multi_reduction <maximumf>, %53, %cst_27 [1] : vector<8x8xf32> to vector<8xf32>
    %55 = vector.shape_cast %54 : vector<8xf32> to vector<8x1xf32>
    %56 = vector.broadcast %55 : vector<8x1xf32> to vector<8x8xf32>
    %57 = arith.subf %53, %56 : vector<8x8xf32>
    %58 = math.exp %57 : vector<8x8xf32>
    %cst_28 = arith.constant dense<0.000000e+00> : vector<8xf32>
    %59 = vector.multi_reduction <add>, %58, %cst_28 [1] : vector<8x8xf32> to vector<8xf32>
    %60 = vector.shape_cast %59 : vector<8xf32> to vector<8x1xf32>
    %cst_29 = arith.constant 1.000000e+00 : f32
    %61 = vector.broadcast %cst_29 : f32 to vector<8x1xf32>
    %62 = arith.divf %61, %60 : vector<8x1xf32>
    %63 = vector.broadcast %62 : vector<8x1xf32> to vector<8x8xf32>
    %64 = arith.mulf %58, %63 : vector<8x8xf32>
    %c0_30 = arith.constant 0 : index
    %c0_31 = arith.constant 0 : index
    %c16 = arith.constant 16 : index
    %65 = vector.load %arg7[%c0_30, %c0_31, %c16] : memref<1x8x32xf32, #tpu.memory_space<vmem>>, vector<1x8x8xf32>
    %66 = vector.shape_cast %65 : vector<1x8x8xf32> to vector<8x8xf32>
    %67 = vector.shape_cast %64 : vector<8x8xf32> to vector<1x8x8xf32>
    tpu.vector_store %arg7[%c0_30, %c0_31, %c16], %67 {strides = array<i32>} : memref<1x8x32xf32, #tpu.memory_space<vmem>>, vector<1x8x8xf32>,
    %cst_32 = arith.constant dense<0.000000e+00> : vector<8x8xf32>
    %68 = tpu.matmul %64, %52, %cst_32 {dimension_numbers = #tpu.dot_dimension_numbers<[1], [0], [0], [1], [0, 0, 1, 1], [], []>} : vector<8x8xf32>, vector<8x8xf32>, vector<8x8xf32> -> vector<8x8xf32>
    %c0_33 = arith.constant 0 : index
    %c16_34 = arith.constant 16 : index
    %69 = vector.load %arg8[%c0_33, %c16_34] : memref<8x32xf32, #tpu.memory_space<vmem>>, vector<8x8xf32>
    tpu.vector_store %arg8[%c0_33, %c16_34], %68 {strides = array<i32>} : memref<8x32xf32, #tpu.memory_space<vmem>>, vector<8x8xf32>,
    %70 = vector.extract_strided_slice %9 {offsets = [0, 24], sizes = [8, 8], strides = [1, 1]} : vector<8x32xf32> to vector<8x8xf32>
    %71 = vector.extract_strided_slice %6 {offsets = [0, 56], sizes = [8, 8], strides = [1, 1]} : vector<8x96xf32> to vector<8x8xf32>
    %72 = vector.extract_strided_slice %6 {offsets = [0, 88], sizes = [8, 8], strides = [1, 1]} : vector<8x96xf32> to vector<8x8xf32>
    %cst_35 = arith.constant dense<0.000000e+00> : vector<8x8xf32>
    %73 = tpu.matmul %70, %71, %cst_35 {dimension_numbers = #tpu.dot_dimension_numbers<[1], [1], [0], [0], [0, 0, 1, 0], [], []>} : vector<8x8xf32>, vector<8x8xf32>, vector<8x8xf32> -> vector<8x8xf32>
    %cst_36 = arith.constant dense<0xFF800000> : vector<8xf32>
    %74 = vector.multi_reduction <maximumf>, %73, %cst_36 [1] : vector<8x8xf32> to vector<8xf32>
    %75 = vector.shape_cast %74 : vector<8xf32> to vector<8x1xf32>
    %76 = vector.broadcast %75 : vector<8x1xf32> to vector<8x8xf32>
    %77 = arith.subf %73, %76 : vector<8x8xf32>
    %78 = math.exp %77 : vector<8x8xf32>
    %cst_37 = arith.constant dense<0.000000e+00> : vector<8xf32>
    %79 = vector.multi_reduction <add>, %78, %cst_37 [1] : vector<8x8xf32> to vector<8xf32>
    %80 = vector.shape_cast %79 : vector<8xf32> to vector<8x1xf32>
    %cst_38 = arith.constant 1.000000e+00 : f32
    %81 = vector.broadcast %cst_38 : f32 to vector<8x1xf32>
    %82 = arith.divf %81, %80 : vector<8x1xf32>
    %83 = vector.broadcast %82 : vector<8x1xf32> to vector<8x8xf32>
    %84 = arith.mulf %78, %83 : vector<8x8xf32>
    %c0_39 = arith.constant 0 : index
    %c0_40 = arith.constant 0 : index
    %c24 = arith.constant 24 : index
    %85 = vector.load %arg7[%c0_39, %c0_40, %c24] : memref<1x8x32xf32, #tpu.memory_space<vmem>>, vector<1x8x8xf32>
    %86 = vector.shape_cast %85 : vector<1x8x8xf32> to vector<8x8xf32>
    %87 = vector.shape_cast %84 : vector<8x8xf32> to vector<1x8x8xf32>
    tpu.vector_store %arg7[%c0_39, %c0_40, %c24], %87 {strides = array<i32>} : memref<1x8x32xf32, #tpu.memory_space<vmem>>, vector<1x8x8xf32>,
    %cst_41 = arith.constant dense<0.000000e+00> : vector<8x8xf32>
    %88 = tpu.matmul %84, %72, %cst_41 {dimension_numbers = #tpu.dot_dimension_numbers<[1], [0], [0], [1], [0, 0, 1, 1], [], []>} : vector<8x8xf32>, vector<8x8xf32>, vector<8x8xf32> -> vector<8x8xf32>
    %c0_42 = arith.constant 0 : index
    %c24_43 = arith.constant 24 : index
    %89 = vector.load %arg8[%c0_42, %c24_43] : memref<8x32xf32, #tpu.memory_space<vmem>>, vector<8x8xf32>
    tpu.vector_store %arg8[%c0_42, %c24_43], %88 {strides = array<i32>} : memref<8x32xf32, #tpu.memory_space<vmem>>, vector<8x8xf32>,
    %c0_44 = arith.constant 0 : index
    %c0_45 = arith.constant 0 : index
    %90 = vector.load %arg8[%c0_44, %c0_45] : memref<8x32xf32, #tpu.memory_space<vmem>>, vector<8x32xf32>
    %c0_46 = arith.constant 0 : index
    %c0_47 = arith.constant 0 : index
    %91 = vector.load %arg4[%c0_46, %c0_47] : memref<32x32xf32, #tpu.memory_space<vmem>>, vector<32x32xf32>
    %cst_48 = arith.constant dense<0.000000e+00> : vector<8x32xf32>
    %92 = tpu.matmul %90, %91, %cst_48 {dimension_numbers = #tpu.dot_dimension_numbers<[1], [0], [0], [1], [0, 0, 1, 1], [], []>} : vector<8x32xf32>, vector<32x32xf32>, vector<8x32xf32> -> vector<8x32xf32>
    %c0_49 = arith.constant 0 : index
    %c0_50 = arith.constant 0 : index
    %93 = vector.load %arg5[%c0_49, %c0_50] : memref<1x32xf32, #tpu.memory_space<vmem>>, vector<1x32xf32>
    %94 = vector.broadcast %93 : vector<1x32xf32> to vector<8x32xf32>
    %95 = arith.addf %92, %94 : vector<8x32xf32>
    %c0_51 = arith.constant 0 : index
    %c0_52 = arith.constant 0 : index
    %c0_53 = arith.constant 0 : index
    %96 = vector.load %arg6[%c0_51, %c0_52, %c0_53] : memref<1x8x32xf32, #tpu.memory_space<vmem>>, vector<1x8x32xf32>
    %97 = vector.shape_cast %96 : vector<1x8x32xf32> to vector<8x32xf32>
    %98 = vector.shape_cast %95 : vector<8x32xf32> to vector<1x8x32xf32>
    tpu.vector_store %arg6[%c0_51, %c0_52, %c0_53], %98 {strides = array<i32>} : memref<1x8x32xf32, #tpu.memory_space<vmem>>, vector<1x8x32xf32>,
    return
  }
  func.func @transform_0(%arg0: i32) -> (i32, i32, i32) {
    %c0_i32 = arith.constant 0 : i32
    %c0_i32_0 = arith.constant 0 : i32
    %c0_i32_1 = arith.constant 0 : i32
    return %arg0, %c0_i32, %c0_i32_0 : i32, i32, i32
  }
  func.func @transform_1(%arg0: i32) -> (i32, i32) {
    %c0_i32 = arith.constant 0 : i32
    %c0_i32_0 = arith.constant 0 : i32
    %c0_i32_1 = arith.constant 0 : i32
    return %c0_i32, %c0_i32_0 : i32, i32
  }
  func.func @transform_2(%arg0: i32) -> (i32, i32) {
    %c0_i32 = arith.constant 0 : i32
    %c0_i32_0 = arith.constant 0 : i32
    %c0_i32_1 = arith.constant 0 : i32
    return %c0_i32, %c0_i32_0 : i32, i32
  }
  func.func @transform_3(%arg0: i32) -> (i32, i32) {
    %c0_i32 = arith.constant 0 : i32
    %c0_i32_0 = arith.constant 0 : i32
    %c0_i32_1 = arith.constant 0 : i32
    return %c0_i32, %c0_i32_0 : i32, i32
  }
  func.func @transform_4(%arg0: i32) -> (i32, i32) {
    %c0_i32 = arith.constant 0 : i32
    %c0_i32_0 = arith.constant 0 : i32
    %c0_i32_1 = arith.constant 0 : i32
    return %c0_i32, %c0_i32_0 : i32, i32
  }
  func.func @transform_5(%arg0: i32) -> (i32, i32, i32) {
    %c0_i32 = arith.constant 0 : i32
    %c0_i32_0 = arith.constant 0 : i32
    %c0_i32_1 = arith.constant 0 : i32
    return %arg0, %c0_i32, %c0_i32_0 : i32, i32, i32
  }
  func.func @transform_6(%arg0: i32) -> (i32, i32, i32) {
    %c0_i32 = arith.constant 0 : i32
    %c0_i32_0 = arith.constant 0 : i32
    %c0_i32_1 = arith.constant 0 : i32
    return %arg0, %c0_i32, %c0_i32_0 : i32, i32, i32
  }
}

</mosaic_0001>

<llo_original>
// kernel: tpu_custom_call.1
$region0: #{tpu_custom_call.1}
  #allocation0 [shape = 'u32[]', space=smem, size = 0x4, offset = 0x4, fixed_abs, tag = 'smem constant byte address 0x4 - core index']
  #allocation1 [shape = 'u32[144,128]{1,0:T(1,128)}', space=vmem, size = 0x12000, scoped, tag = 'internal scratch']
  #allocation2 [shape = 'f32[8,32]{1,0:T(8,128)}', space=vmem, size = 0x1000, scoped, tag = 'scratch operand']
  %s0 = inlined_call_operand.hbm [shape: f32[2,8,32], index: 0, kind: input, shape index: {}]
  %s1 = inlined_call_operand.hbm [shape: f32[32,96], index: 1, kind: input, shape index: {}]
  %s2 = inlined_call_operand.vmem [shape: f32[1,96], index: 2, kind: input, shape index: {}]
  %s3 = inlined_call_operand.hbm [shape: f32[32,32], index: 3, kind: input, shape index: {}]
  %s4 = inlined_call_operand.vmem [shape: f32[1,32], index: 4, kind: input, shape index: {}]
  %s5 = inlined_call_operand.hbm [shape: f32[2,8,32], index: 5, kind: output, shape index: {0}]
  %s6 = inlined_call_operand.hbm [shape: f32[2,8,32], index: 6, kind: output, shape index: {1}]
  %7 = xla_tuple %s5, %s6
  %s8 = sld [smem:[#allocation0]]
  $region73: #{tpu_custom_call.1} parent=0
    _
  %s10 = ssub.s32 1, %s8
  %s11 = scalar_select 0, %s10, %s8
  $region1: #{tpu_custom_call.1} parent=0
    #allocation3 [shape = 'u8[8192]{0}', space=vmem, size = 0x2000, scoped, tag = 'input window, operand 0']
    #allocation4 [shape = 's32[2]{0}', space=sflag, size = 0x8, scoped, tag = 'scoped memory for tpu_custom_call.1']
    #allocation5 [shape = 's32[2]{0}', space=sflag, size = 0x8, scoped, tag = 'scoped memory for tpu_custom_call.1']
    #allocation6 [shape = 'u8[16384]{0}', space=vmem, size = 0x4000, scoped, tag = 'input window, operand 1, single buffered']
    #allocation7 [shape = 's32[1]{0}', space=sflag, size = 0x4, scoped, tag = 'scoped memory for tpu_custom_call.1']
    #allocation8 [shape = 'u8[16384]{0}', space=vmem, size = 0x4000, scoped, tag = 'input window, operand 3, single buffered']
    #allocation9 [shape = 'u8[8192]{0}', space=vmem, size = 0x2000, scoped, tag = 'output window, operand 0']
    #allocation10 [shape = 'u8[8192]{0}', space=vmem, size = 0x2000, scoped, tag = 'output window, operand 1']
    #allocation11 [shape = 's32[2]{0}', space=sflag, size = 0x8, scoped, tag = 'scoped memory for tpu_custom_call.1']
    %12 = vsyncpa [#allocation4], 0
    %s13 = scalar_lea.sflag [#allocation4], 1
    %14 = vsyncpa %s13, 0
    %15 = vsyncpa [#allocation7], 0
    %16 = vsyncpa [#allocation5], 0
    %s17 = scalar_lea.sflag [#allocation5], 1
    %18 = vsyncpa %s17, 0
    %19 = vsyncpa [#allocation11], 0
    %s20 = scalar_lea.sflag [#allocation11], 1
    %21 = vsyncpa %s20, 0
    loop: start=0, step=1, limit=4
    $region2: #{tpu_custom_call.1} parent=1 // loop_pre_header
      _
    $region3: #{tpu_custom_call.1} parent=1 // loop_header
      %s23 = sphi 0, %s27
      %p24 = scmp.ge.s32.totalorder %s23, 4
      %s33 = sphi 0, %s35
      %s36 = sphi 0, %s33
      %s37 = sphi 0, %s36
      %s53 = sphi 0, %s37
      %s57 = sphi 0, %s57
      %s59 = sphi 0, %s57
      %s60 = sphi 0, %s59
      %s74 = sphi 0, %s60
      %s78 = sphi 0, %s78
      %s80 = sphi 0, %s78
      %s81 = sphi 0, %s80
      %s95 = sphi 0, %s81
      %s99 = sphi 0, %s99
      %s101 = sphi 0, %s99
      %s102 = sphi 0, %s101
      %s116 = sphi 0, %s102
      %s120 = sphi 0, %s120
      %s122 = sphi 0, %s120
      %s123 = sphi 0, %s122
      %s137 = sphi 0, %s123
      %s143 = sphi 0, %s145
      %s146 = sphi 0, %s143
      %s147 = sphi 0, %s146
      %s163 = sphi 0, %s147
      %s169 = sphi 0, %s171
      %s172 = sphi 0, %s169
      %s173 = sphi 0, %s172
      %s189 = sphi 0, %s173
    $region4: #{tpu_custom_call.1} parent=1 // loop_header_branch
      %26 = sbr.rel (%p24) target = $region8
    $region5: #{tpu_custom_call.1} parent=1 // loop_body
      %s28 = ssub.s32 %s23, 1
      %s29 = ssub.s32 %s23, 2
      %s30 = sadd.s32 %s23, 1
      %s31 = ssub.s32 %s23, %s30
      %p32 = scmp.eq.s32.totalorder %s31, 0
      %s34 = sadd.s32 %s33, 1
      %s35 = scalar_select %p32, %s33, %s34
      %p38 = pneg %p32
      %p39 = scmp.eq.s32.totalorder %s23, 1
      %p40 = por %p38, %p39
      %p41 = scmp.ne.s32.totalorder %s33, %s36
      %p42 = scmp.eq.s32.totalorder %s23, 0
      %p43 = por %p41, %p42
      %p44 = scmp.ne.s32.totalorder %s33, %s36
      %p45 = scmp.eq.s32.totalorder %s28, 1
      %p46 = por %p44, %p45
      %p47 = scmp.ne.s32.totalorder %s36, %s37
      %p48 = scmp.eq.s32.totalorder %s28, 0
      %p49 = por %p47, %p48
      %p50 = scmp.ne.s32.totalorder %s36, %s37
      %p51 = scmp.eq.s32.totalorder %s29, 1
      %p52 = por %p50, %p51
      %p54 = scmp.ne.s32.totalorder %s37, %s53
      %p55 = scmp.eq.s32.totalorder %s29, 0
      %p56 = por %p54, %p55
      %s58 = sadd.s32 %s57, 1
      %p61 = scmp.eq.s32.totalorder %s23, 1
      %p62 = scmp.ne.s32.totalorder %s57, %s59
      %p63 = scmp.eq.s32.totalorder %s23, 0
      %p64 = por %p62, %p63
      %p65 = scmp.ne.s32.totalorder %s57, %s59
      %p66 = scmp.eq.s32.totalorder %s28, 1
      %p67 = por %p65, %p66
      %p68 = scmp.ne.s32.totalorder %s59, %s60
      %p69 = scmp.eq.s32.totalorder %s28, 0
      %p70 = por %p68, %p69
      %p71 = scmp.ne.s32.totalorder %s59, %s60
      %p72 = scmp.eq.s32.totalorder %s29, 1
      %p73 = por %p71, %p72
      %p75 = scmp.ne.s32.totalorder %s60, %s74
      %p76 = scmp.eq.s32.totalorder %s29, 0
      %p77 = por %p75, %p76
      %s79 = sadd.s32 %s78, 1
      %p82 = scmp.eq.s32.totalorder %s23, 1
      %p83 = scmp.ne.s32.totalorder %s78, %s80
      %p84 = scmp.eq.s32.totalorder %s23, 0
      %p85 = por %p83, %p84
      %p86 = scmp.ne.s32.totalorder %s78, %s80
      %p87 = scmp.eq.s32.totalorder %s28, 1
      %p88 = por %p86, %p87
      %p89 = scmp.ne.s32.totalorder %s80, %s81
      %p90 = scmp.eq.s32.totalorder %s28, 0
      %p91 = por %p89, %p90
      %p92 = scmp.ne.s32.totalorder %s80, %s81
      %p93 = scmp.eq.s32.totalorder %s29, 1
      %p94 = por %p92, %p93
      %p96 = scmp.ne.s32.totalorder %s81, %s95
      %p97 = scmp.eq.s32.totalorder %s29, 0
      %p98 = por %p96, %p97
      %s100 = sadd.s32 %s99, 1
      %p103 = scmp.eq.s32.totalorder %s23, 1
      %p104 = scmp.ne.s32.totalorder %s99, %s101
      %p105 = scmp.eq.s32.totalorder %s23, 0
      %p106 = por %p104, %p105
      %p107 = scmp.ne.s32.totalorder %s99, %s101
      %p108 = scmp.eq.s32.totalorder %s28, 1
      %p109 = por %p107, %p108
      %p110 = scmp.ne.s32.totalorder %s101, %s102
      %p111 = scmp.eq.s32.totalorder %s28, 0
      %p112 = por %p110, %p111
      %p113 = scmp.ne.s32.totalorder %s101, %s102
      %p114 = scmp.eq.s32.totalorder %s29, 1
      %p115 = por %p113, %p114
      %p117 = scmp.ne.s32.totalorder %s102, %s116
      %p118 = scmp.eq.s32.totalorder %s29, 0
      %p119 = por %p117, %p118
      %s121 = sadd.s32 %s120, 1
      %p124 = scmp.eq.s32.totalorder %s23, 1
      %p125 = scmp.ne.s32.totalorder %s120, %s122
      %p126 = scmp.eq.s32.totalorder %s23, 0
      %p127 = por %p125, %p126
      %p128 = scmp.ne.s32.totalorder %s120, %s122
      %p129 = scmp.eq.s32.totalorder %s28, 1
      %p130 = por %p128, %p129
      %p131 = scmp.ne.s32.totalorder %s122, %s123
      %p132 = scmp.eq.s32.totalorder %s28, 0
      %p133 = por %p131, %p132
      %p134 = scmp.ne.s32.totalorder %s122, %s123
      %p135 = scmp.eq.s32.totalorder %s29, 1
      %p136 = por %p134, %p135
      %p138 = scmp.ne.s32.totalorder %s123, %s137
      %p139 = scmp.eq.s32.totalorder %s29, 0
      %p140 = por %p138, %p139
      %s141 = ssub.s32 %s23, %s30
      %p142 = scmp.eq.s32.totalorder %s141, 0
      %s144 = sadd.s32 %s143, 1
      %s145 = scalar_select %p142, %s143, %s144
      %p148 = pneg %p142
      %p149 = scmp.eq.s32.totalorder %s23, 1
      %p150 = por %p148, %p149
      %p151 = scmp.ne.s32.totalorder %s143, %s146
      %p152 = scmp.eq.s32.totalorder %s23, 0
      %p153 = por %p151, %p152
      %p154 = scmp.ne.s32.totalorder %s143, %s146
      %p155 = scmp.eq.s32.totalorder %s28, 1
      %p156 = por %p154, %p155
      %p157 = scmp.ne.s32.totalorder %s146, %s147
      %p158 = scmp.eq.s32.totalorder %s28, 0
      %p159 = por %p157, %p158
      %p160 = scmp.ne.s32.totalorder %s146, %s147
      %p161 = scmp.eq.s32.totalorder %s29, 1
      %p162 = por %p160, %p161
      %p164 = scmp.ne.s32.totalorder %s147, %s163
      %p165 = scmp.eq.s32.totalorder %s29, 0
      %p166 = por %p164, %p165
      %s167 = ssub.s32 %s23, %s30
      %p168 = scmp.eq.s32.totalorder %s167, 0
      %s170 = sadd.s32 %s169, 1
      %s171 = scalar_select %p168, %s169, %s170
      %p174 = pneg %p168
      %p175 = scmp.eq.s32.totalorder %s23, 1
      %p176 = por %p174, %p175
      %p177 = scmp.ne.s32.totalorder %s169, %s172
      %p178 = scmp.eq.s32.totalorder %s23, 0
      %p179 = por %p177, %p178
      %p180 = scmp.ne.s32.totalorder %s169, %s172
      %p181 = scmp.eq.s32.totalorder %s28, 1
      %p182 = por %p180, %p181
      %p183 = scmp.ne.s32.totalorder %s172, %s173
      %p184 = scmp.eq.s32.totalorder %s28, 0
      %p185 = por %p183, %p184
      %p186 = scmp.ne.s32.totalorder %s172, %s173
      %p187 = scmp.eq.s32.totalorder %s29, 1
      %p188 = por %p186, %p187
      %p190 = scmp.ne.s32.totalorder %s173, %s189
      %p191 = scmp.eq.s32.totalorder %s29, 0
      %p192 = por %p190, %p191
      %p193 = scmp.le.s32.totalorder 1, %s23
      %p194 = scmp.lt.s32.totalorder %s23, 3
      %p195 = pnand %p193, %p194
      %p196 = pneg %p195
      // Predicated region
      $region9: #{tpu_custom_call.1} parent=5 // pred_check
        _
      $region10: #{tpu_custom_call.1} parent=5 // pred_check_branch
        %198 = sbr.rel (%p195) target = $region12
      $region11: #{tpu_custom_call.1} parent=5 // pred_region
        %s199 = ssub.s32 %s23, 1
        // Predicated region
        $region13: #{tpu_custom_call.1} parent=11 // pred_check
          %p200 = pneg %p70
        $region14: #{tpu_custom_call.1} parent=11 // pred_check_branch
          %202 = sbr.rel (%p200) target = $region16
        $region15: #{tpu_custom_call.1} parent=11 // pred_region
          %s204 = ssub.s32 512, 512
          %205 = vsyncadd [#allocation7], %s204
          %s206 = sshll.u32 [#allocation6], 4
          %s207 = int_to_ptr.vmem [resolvable:$true] %s206
          %212 = dma.hbm_to_vmem [thread:$0]  %s1, 512, %s207, [#allocation7], 128, 128, 8
        $region16: #{tpu_custom_call.1} parent=11 // pred_fallthru
          _
        // Predicated region
        $region17: #{tpu_custom_call.1} parent=11 // pred_check
          %p213 = pneg %p91
        $region18: #{tpu_custom_call.1} parent=11 // pred_check_branch
          %215 = sbr.rel (%p213) target = $region20
        $region19: #{tpu_custom_call.1} parent=11 // pred_region
          _
        $region20: #{tpu_custom_call.1} parent=11 // pred_fallthru
          _
        // Predicated region
        $region21: #{tpu_custom_call.1} parent=11 // pred_check
          %p216 = pneg %p112
        $region22: #{tpu_custom_call.1} parent=11 // pred_check_branch
          %218 = sbr.rel (%p216) target = $region24
        $region23: #{tpu_custom_call.1} parent=11 // pred_region
          %s220 = ssub.s32 512, 512
          %221 = vsyncadd [#allocation7], %s220
          %s222 = sshll.u32 [#allocation8], 4
          %s223 = int_to_ptr.vmem [resolvable:$true] %s222
          %228 = dma.hbm_to_vmem [thread:$0]  %s3, 512, %s223, [#allocation7], 128, 128, 8
        $region24: #{tpu_custom_call.1} parent=11 // pred_fallthru
          _
        // Predicated region
        $region25: #{tpu_custom_call.1} parent=11 // pred_check
          %p229 = pneg %p133
        $region26: #{tpu_custom_call.1} parent=11 // pred_check_branch
          %231 = sbr.rel (%p229) target = $region28
        $region27: #{tpu_custom_call.1} parent=11 // pred_region
          _
        $region28: #{tpu_custom_call.1} parent=11 // pred_fallthru
          _
      $region12: #{tpu_custom_call.1} parent=5 // pred_fallthru
        _
      %p232 = scmp.lt.s32.totalorder %s23, 2
      // Predicated region
      $region29: #{tpu_custom_call.1} parent=5 // pred_check
        %p233 = pneg %p232
      $region30: #{tpu_custom_call.1} parent=5 // pred_check_branch
        %235 = sbr.rel (%p233) target = $region32
      $region31: #{tpu_custom_call.1} parent=5 // pred_region
        // Predicated region
        $region33: #{tpu_custom_call.1} parent=31 // pred_check
          %p236 = pneg %p43
        $region34: #{tpu_custom_call.1} parent=31 // pred_check_branch
          %238 = sbr.rel (%p236) target = $region36
        $region35: #{tpu_custom_call.1} parent=31 // pred_region
          %s239 = sand.u32 %s33, 1
          %s240 = scalar_lea.sflag [#allocation4], %s239
          %s241 = sand.u32 %s33, 1
          %s242 = smul.addr %s241, 8
          %s243 = scalar_lea.vmem [#allocation3], %s242
          %s245 = ssub.s32 128, 128
          %246 = vsyncadd %s240, %s245
          %s247 = smul.addr %s23, 128
          %s248 = scalar_lea.hbm %s0, %s247
          %s250 = sshll.u32 %s243, 4
          %s251 = int_to_ptr.vmem [resolvable:$true] %s250
          %253 = dma.hbm_to_vmem [thread:$0]  %s248, 128, %s251, %s240
        $region36: #{tpu_custom_call.1} parent=31 // pred_fallthru
          _
      $region32: #{tpu_custom_call.1} parent=5 // pred_fallthru
        _
      %p254 = scmp.le.s32.totalorder 1, %s23
      %p255 = scmp.lt.s32.totalorder %s23, 3
      %p256 = pnand %p254, %p255
      %p257 = pneg %p256
      // Predicated region
      $region37: #{tpu_custom_call.1} parent=5 // pred_check
        _
      $region38: #{tpu_custom_call.1} parent=5 // pred_check_branch
        %259 = sbr.rel (%p256) target = $region40
      $region39: #{tpu_custom_call.1} parent=5 // pred_region
        %s260 = ssub.s32 %s23, 1
        %s261 = sand.u32 %s36, 1
        %s262 = scalar_lea.sflag [#allocation4], %s261
        %s263 = sand.u32 %s36, 1
        %s264 = smul.addr %s263, 8
        %s265 = scalar_lea.vmem [#allocation3], %s264
        // Predicated region
        $region41: #{tpu_custom_call.1} parent=39 // pred_check
          %p266 = pneg %p49
        $region42: #{tpu_custom_call.1} parent=39 // pred_check_branch
          %268 = sbr.rel (%p266) target = $region44
        $region43: #{tpu_custom_call.1} parent=39 // pred_region
          %269 = dma.done %s262, 128
        $region44: #{tpu_custom_call.1} parent=39 // pred_fallthru
          _
        // Predicated region
        $region45: #{tpu_custom_call.1} parent=39 // pred_check
          %p270 = pneg %p70
        $region46: #{tpu_custom_call.1} parent=39 // pred_check_branch
          %272 = sbr.rel (%p270) target = $region48
        $region47: #{tpu_custom_call.1} parent=39 // pred_region
          %273 = dma.done [#allocation7], 512
        $region48: #{tpu_custom_call.1} parent=39 // pred_fallthru
          _
        // Predicated region
        $region49: #{tpu_custom_call.1} parent=39 // pred_check
          %p274 = pneg %p112
        $region50: #{tpu_custom_call.1} parent=39 // pred_check_branch
          %276 = sbr.rel (%p274) target = $region52
        $region51: #{tpu_custom_call.1} parent=39 // pred_region
          %277 = dma.done [#allocation7], 512
        $region52: #{tpu_custom_call.1} parent=39 // pred_fallthru
          _
        %s278 = sand.u32 %s36, 1
        %s279 = scalar_lea.sflag [#allocation4], %s278
        %s280 = sand.u32 %s36, 1
        %s281 = smul.addr %s280, 8
        %s282 = scalar_lea.vmem [#allocation3], %s281
        %p283 = pneg %p49
        %p284 = pneg %p46
        %p285 = pneg %p70
        %p286 = pneg %p67
        %p287 = pneg %p91
        %p288 = pneg %p88
        %p289 = pneg %p112
        %p290 = pneg %p109
        %p291 = pneg %p133
        %p292 = pneg %p130
        %p293 = pneg %p159
        %p294 = pneg %p156
        %s295 = sand.u32 %s146, 1
        %s296 = scalar_lea.sflag [#allocation5], %s295
        %s297 = sand.u32 %s146, 1
        %s298 = smul.addr %s297, 8
        %s299 = scalar_lea.vmem [#allocation9], %s298
        %p300 = pneg %p185
        %p301 = pneg %p182
        %s302 = sand.u32 %s172, 1
        %s303 = scalar_lea.sflag [#allocation11], %s302
        %s304 = sand.u32 %s172, 1
        %s305 = smul.addr %s304, 8
        %s306 = scalar_lea.vmem [#allocation10], %s305
        %v307 = vld [vmem:[%s265] sm:$0xff]
        %v308 = vld [vmem:[#allocation6] sm:$0xff]
        %v309 = vld [vmem:[#allocation6 + $0x8] sm:$0xff]
        %v310 = vld [vmem:[#allocation6 + $0x10] sm:$0xff]
        %v311 = vld [vmem:[#allocation6 + $0x18] sm:$0xff]
        %v312 = vld [vmem:[%s2] sm:$0x1]
        %v314 = vlaneseq
        %v315 = vshrl.u32 %v314, 7
        %v316 = vsub.s32 0, %v315
        %v317 = vrot.slane %v312, %v316
        %vm319 = vcmask 261120
        %v321 = vsel %vm319, %v307, 0
        %323 = vmatprep.subr.mxu0 0.0
        %324 = vmatpush1.msra.mxu0 %v308
        %325 = vmatprep.subr.mxu0 0.0
        %326 = vmatpush1.msra.mxu0 %v309
        %327 = vmatprep.subr.mxu0 0.0
        %328 = vmatpush1.msra.mxu0 %v310
        %329 = vmatprep.subr.mxu0 0.0
        %330 = vmatpush1.msra.mxu0 %v311
        %331 = vmatprep.subr.mxu0 0.0
        %332 = vmatpush1.msra.mxu0 0.0
        %333 = vmatprep.subr.mxu0 0.0
        %334 = vmatpush1.msra.mxu0 0.0
        %335 = vmatprep.subr.mxu0 0.0
        %336 = vmatpush1.msra.mxu0 0.0
        %337 = vmatprep.subr.mxu0 0.0
        %338 = vmatpush1.msra.mxu0 0.0
        %339 = vmatprep.subr.mxu0 0.0
        %340 = vmatpush1.msra.mxu0 0.0
        %341 = vmatprep.subr.mxu0 0.0
        %342 = vmatpush1.msra.mxu0 0.0
        %343 = vmatprep.subr.mxu0 0.0
        %344 = vmatpush1.msra.mxu0 0.0
        %345 = vmatprep.subr.mxu0 0.0
        %346 = vmatpush1.msra.mxu0 0.0
        %347 = vmatprep.subr.mxu0 0.0
        %348 = vmatpush1.msra.mxu0 0.0
        %349 = vmatprep.subr.mxu0 0.0
        %350 = vmatpush1.msra.mxu0 0.0
        %351 = vmatprep.subr.mxu0 0.0
        %352 = vmatpush1.msra.mxu0 0.0
        %353 = vmatprep.subr.mxu0 0.0
        %354 = vmatpush1.msra.mxu0 0.0
        %355 = vmatprep.subr.mxu0 0.0
        %356 = vmatpush1.msra.mxu0 0.0
        %357 = vmatprep.subr.mxu0 0.0
        %358 = vmatpush1.msra.mxu0 0.0
        %359 = vmatprep.subr.mxu0 0.0
        %360 = vmatpush1.msra.mxu0 0.0
        %361 = vmatprep.subr.mxu0 0.0
        %362 = vmatpush1.msra.mxu0 0.0
        %363 = vmatprep.subr.mxu0 0.0
        %364 = vmatpush1.msra.mxu0 0.0
        %365 = vmatprep.subr.mxu0 0.0
        %366 = vmatpush1.msra.mxu0 0.0
        %367 = vmatprep.subr.mxu0 0.0
        %368 = vmatpush1.msra.mxu0 0.0
        %369 = vmatprep.subr.mxu0 0.0
        %370 = vmatpush1.msra.mxu0 0.0
        %371 = vmatprep.subr.mxu0 0.0
        %372 = vmatpush1.msra.mxu0 0.0
        %373 = vmatprep.subr.mxu0 0.0
        %374 = vmatpush1.msra.mxu0 0.0
        %375 = vmatprep.subr.mxu0 0.0
        %376 = vmatpush1.msra.mxu0 0.0
        %377 = vmatprep.subr.mxu0 0.0
        %378 = vmatpush1.msra.mxu0 0.0
        %379 = vmatprep.subr.mxu0 0.0
        %380 = vmatpush1.msra.mxu0 0.0
        %381 = vmatprep.subr.mxu0 0.0
        %382 = vmatpush1.msra.mxu0 0.0
        %383 = vmatprep.subr.mxu0 0.0
        %384 = vmatpush1.msra.mxu0 0.0
        %385 = vmatprep.subr.mxu0 0.0
        %386 = vmatpush1.msra.mxu0 0.0
        %387 = vmatprep.mubr.f32.mxu0 0.0
        %388 = vmatmul.mubr.f32.gmra.mrb[0].mxu0 %v321
        %v389 = vpop.f32.mrb[0].mxu0
        %v390 = vadd.f32 %v317, %v389
        %v391 = vpop.f32.mrb[0].mxu0
        %392 = vdwg.mxu0
        %v393 = vmul.f32 %v390, 0.35355338
        %395 = vrot.lane.b32.xlu0 %v390, 96
        %v396 = vpop.permute.xlu0 %395
        %vm397 = vcmask 64512
        %v399 = vsel %vm397, %v393, 0
        %v401 = vsel %vm397, %v396, 0
        %403 = vmatprep.subr.mxu0 0.0
        %404 = vmatpush1.xpose.msra.mxu0 %v401
        %405 = vmatprep.subr.mxu0 0.0
        %406 = vmatpush1.xpose.msra.mxu0 0.0
        %407 = vmatprep.subr.mxu0 0.0
        %408 = vmatpush1.xpose.msra.mxu0 0.0
        %409 = vmatprep.subr.mxu0 0.0
        %410 = vmatpush1.xpose.msra.mxu0 0.0
        %411 = vmatprep.subr.mxu0 0.0
        %412 = vmatpush1.xpose.msra.mxu0 0.0
        %413 = vmatprep.subr.mxu0 0.0
        %414 = vmatpush1.xpose.msra.mxu0 0.0
        %415 = vmatprep.subr.mxu0 0.0
        %416 = vmatpush1.xpose.msra.mxu0 0.0
        %417 = vmatprep.subr.mxu0 0.0
        %418 = vmatpush1.xpose.msra.mxu0 0.0
        %419 = vmatprep.subr.mxu0 0.0
        %420 = vmatpush1.xpose.msra.mxu0 0.0
        %421 = vmatprep.subr.mxu0 0.0
        %422 = vmatpush1.xpose.msra.mxu0 0.0
        %423 = vmatprep.subr.mxu0 0.0
        %424 = vmatpush1.xpose.msra.mxu0 0.0
        %425 = vmatprep.subr.mxu0 0.0
        %426 = vmatpush1.xpose.msra.mxu0 0.0
        %427 = vmatprep.subr.mxu0 0.0
        %428 = vmatpush1.xpose.msra.mxu0 0.0
        %429 = vmatprep.subr.mxu0 0.0
        %430 = vmatpush1.xpose.msra.mxu0 0.0
        %431 = vmatprep.subr.mxu0 0.0
        %432 = vmatpush1.xpose.msra.mxu0 0.0
        %433 = vmatprep.subr.mxu0 0.0
        %434 = vmatpush1.xpose.msra.mxu0 0.0
        %435 = vmatprep.subr.mxu0 0.0
        %436 = vmatpush1.xpose.msra.mxu0 0.0
        %437 = vmatprep.subr.mxu0 0.0
        %438 = vmatpush1.xpose.msra.mxu0 0.0
        %439 = vmatprep.subr.mxu0 0.0
        %440 = vmatpush1.xpose.msra.mxu0 0.0
        %441 = vmatprep.subr.mxu0 0.0
        %442 = vmatpush1.xpose.msra.mxu0 0.0
        %443 = vmatprep.subr.mxu0 0.0
        %444 = vmatpush1.xpose.msra.mxu0 0.0
        %445 = vmatprep.subr.mxu0 0.0
        %446 = vmatpush1.xpose.msra.mxu0 0.0
        %447 = vmatprep.subr.mxu0 0.0
        %448 = vmatpush1.xpose.msra.mxu0 0.0
        %449 = vmatprep.subr.mxu0 0.0
        %450 = vmatpush1.xpose.msra.mxu0 0.0
        %451 = vmatprep.subr.mxu0 0.0
        %452 = vmatpush1.xpose.msra.mxu0 0.0
        %453 = vmatprep.subr.mxu0 0.0
        %454 = vmatpush1.xpose.msra.mxu0 0.0
        %455 = vmatprep.subr.mxu0 0.0
        %456 = vmatpush1.xpose.msra.mxu0 0.0
        %457 = vmatprep.subr.mxu0 0.0
        %458 = vmatpush1.xpose.msra.mxu0 0.0
        %459 = vmatprep.subr.mxu0 0.0
        %460 = vmatpush1.xpose.msra.mxu0 0.0
        %461 = vmatprep.subr.mxu0 0.0
        %462 = vmatpush1.xpose.msra.mxu0 0.0
        %463 = vmatprep.subr.mxu0 0.0
        %464 = vmatpush1.xpose.msra.mxu0 0.0
        %465 = vmatprep.subr.mxu0 0.0
        %466 = vmatpush1.xpose.msra.mxu0 0.0
        %467 = vmatprep.mubr.f32.mxu0 0.0
        %468 = vmatmul.mubr.f32.gmra.mrb[0].mxu0 %v399
        %v469 = vpop.f32.mrb[0].mxu0
        %v470 = vadd.f32 0.0, %v469
        %v471 = vpop.f32.mrb[0].mxu0
        %472 = vdwg.mxu0
        %v473 = vsel %vm397, %v470, -inf
        %474 = vmax.xlane.f32.xlu0 %v473
        %v475 = vpop.xlane.xlu0 %474
        %v476 = vsub.f32 %v470, %v475
        %v477 = vmul.f32 %v476, 1.442695
        %v478 = vpow.pop %v477
        %v479 = vsel %vm397, %v478, 0.0
        %480 = vadd.xlane.f32.xlu0 %v479
        %v481 = vpop.xlane.xlu0 %480
        %v482 = vrcp.pop %v481
        %v483 = vmul.f32 1.0, %v482
        %v484 = vmul.f32 %v478, %v483
        %485 = vst.msk [vmem:[%s306] sm:$0xff] %vm397, %v484
        %486 = vrot.lane.b32.xlu0 %v390, 64
        %v487 = vpop.permute.xlu0 %486
        %v490 = vsel %vm397, %v484, 0
        %492 = vmatprep.subr.mxu0 0.0
        %493 = vmatpush1.msra.mxu0 %v487
        %494 = vmatprep.subr.mxu0 0.0
        %495 = vmatpush1.msra.mxu0 0.0
        %496 = vmatprep.subr.mxu0 0.0
        %497 = vmatpush1.msra.mxu0 0.0
        %498 = vmatprep.subr.mxu0 0.0
        %499 = vmatpush1.msra.mxu0 0.0
        %500 = vmatprep.subr.mxu0 0.0
        %501 = vmatpush1.msra.mxu0 0.0
        %502 = vmatprep.subr.mxu0 0.0
        %503 = vmatpush1.msra.mxu0 0.0
        %504 = vmatprep.subr.mxu0 0.0
        %505 = vmatpush1.msra.mxu0 0.0
        %506 = vmatprep.subr.mxu0 0.0
        %507 = vmatpush1.msra.mxu0 0.0
        %508 = vmatprep.subr.mxu0 0.0
        %509 = vmatpush1.msra.mxu0 0.0
        %510 = vmatprep.subr.mxu0 0.0
        %511 = vmatpush1.msra.mxu0 0.0
        %512 = vmatprep.subr.mxu0 0.0
        %513 = vmatpush1.msra.mxu0 0.0
        %514 = vmatprep.subr.mxu0 0.0
        %515 = vmatpush1.msra.mxu0 0.0
        %516 = vmatprep.subr.mxu0 0.0
        %517 = vmatpush1.msra.mxu0 0.0
        %518 = vmatprep.subr.mxu0 0.0
        %519 = vmatpush1.msra.mxu0 0.0
        %520 = vmatprep.subr.mxu0 0.0
        %521 = vmatpush1.msra.mxu0 0.0
        %522 = vmatprep.subr.mxu0 0.0
        %523 = vmatpush1.msra.mxu0 0.0
        %524 = vmatprep.subr.mxu0 0.0
        %525 = vmatpush1.msra.mxu0 0.0
        %526 = vmatprep.subr.mxu0 0.0
        %527 = vmatpush1.msra.mxu0 0.0
        %528 = vmatprep.subr.mxu0 0.0
        %529 = vmatpush1.msra.mxu0 0.0
        %530 = vmatprep.subr.mxu0 0.0
        %531 = vmatpush1.msra.mxu0 0.0
        %532 = vmatprep.subr.mxu0 0.0
        %533 = vmatpush1.msra.mxu0 0.0
        %534 = vmatprep.subr.mxu0 0.0
        %535 = vmatpush1.msra.mxu0 0.0
        %536 = vmatprep.subr.mxu0 0.0
        %537 = vmatpush1.msra.mxu0 0.0
        %538 = vmatprep.subr.mxu0 0.0
        %539 = vmatpush1.msra.mxu0 0.0
        %540 = vmatprep.subr.mxu0 0.0
        %541 = vmatpush1.msra.mxu0 0.0
        %542 = vmatprep.subr.mxu0 0.0
        %543 = vmatpush1.msra.mxu0 0.0
        %544 = vmatprep.subr.mxu0 0.0
        %545 = vmatpush1.msra.mxu0 0.0
        %546 = vmatprep.subr.mxu0 0.0
        %547 = vmatpush1.msra.mxu0 0.0
        %548 = vmatprep.subr.mxu0 0.0
        %549 = vmatpush1.msra.mxu0 0.0
        %550 = vmatprep.subr.mxu0 0.0
        %551 = vmatpush1.msra.mxu0 0.0
        %552 = vmatprep.subr.mxu0 0.0
        %553 = vmatpush1.msra.mxu0 0.0
        %554 = vmatprep.subr.mxu0 0.0
        %555 = vmatpush1.msra.mxu0 0.0
        %556 = vmatprep.mubr.f32.mxu0 0.0
        %557 = vmatmul.mubr.f32.gmra.mrb[0].mxu0 %v490
        %v558 = vpop.f32.mrb[0].mxu0
        %v559 = vadd.f32 0.0, %v558
        %v560 = vpop.f32.mrb[0].mxu0
        %561 = vdwg.mxu0
        %562 = vst.msk [vmem:[#allocation2] sm:$0xff] %vm397, %v559
        %563 = vrot.lane.b32.xlu0 %v393, 120
        %v564 = vpop.permute.xlu0 %563
        %565 = vrot.lane.b32.xlu0 %v390, 88
        %v566 = vpop.permute.xlu0 %565
        %v567 = vsel %vm397, %v564, 0
        %v569 = vsel %vm397, %v566, 0
        %571 = vmatprep.subr.mxu0 0.0
        %572 = vmatpush1.xpose.msra.mxu0 %v569
        %573 = vmatprep.subr.mxu0 0.0
        %574 = vmatpush1.xpose.msra.mxu0 0.0
        %575 = vmatprep.subr.mxu0 0.0
        %576 = vmatpush1.xpose.msra.mxu0 0.0
        %577 = vmatprep.subr.mxu0 0.0
        %578 = vmatpush1.xpose.msra.mxu0 0.0
        %579 = vmatprep.subr.mxu0 0.0
        %580 = vmatpush1.xpose.msra.mxu0 0.0
        %581 = vmatprep.subr.mxu0 0.0
        %582 = vmatpush1.xpose.msra.mxu0 0.0
        %583 = vmatprep.subr.mxu0 0.0
        %584 = vmatpush1.xpose.msra.mxu0 0.0
        %585 = vmatprep.subr.mxu0 0.0
        %586 = vmatpush1.xpose.msra.mxu0 0.0
        %587 = vmatprep.subr.mxu0 0.0
        %588 = vmatpush1.xpose.msra.mxu0 0.0
        %589 = vmatprep.subr.mxu0 0.0
        %590 = vmatpush1.xpose.msra.mxu0 0.0
        %591 = vmatprep.subr.mxu0 0.0
        %592 = vmatpush1.xpose.msra.mxu0 0.0
        %593 = vmatprep.subr.mxu0 0.0
        %594 = vmatpush1.xpose.msra.mxu0 0.0
        %595 = vmatprep.subr.mxu0 0.0
        %596 = vmatpush1.xpose.msra.mxu0 0.0
        %597 = vmatprep.subr.mxu0 0.0
        %598 = vmatpush1.xpose.msra.mxu0 0.0
        %599 = vmatprep.subr.mxu0 0.0
        %600 = vmatpush1.xpose.msra.mxu0 0.0
        %601 = vmatprep.subr.mxu0 0.0
        %602 = vmatpush1.xpose.msra.mxu0 0.0
        %603 = vmatprep.subr.mxu0 0.0
        %604 = vmatpush1.xpose.msra.mxu0 0.0
        %605 = vmatprep.subr.mxu0 0.0
        %606 = vmatpush1.xpose.msra.mxu0 0.0
        %607 = vmatprep.subr.mxu0 0.0
        %608 = vmatpush1.xpose.msra.mxu0 0.0
        %609 = vmatprep.subr.mxu0 0.0
        %610 = vmatpush1.xpose.msra.mxu0 0.0
        %611 = vmatprep.subr.mxu0 0.0
        %612 = vmatpush1.xpose.msra.mxu0 0.0
        %613 = vmatprep.subr.mxu0 0.0
        %614 = vmatpush1.xpose.msra.mxu0 0.0
        %615 = vmatprep.subr.mxu0 0.0
        %616 = vmatpush1.xpose.msra.mxu0 0.0
        %617 = vmatprep.subr.mxu0 0.0
        %618 = vmatpush1.xpose.msra.mxu0 0.0
        %619 = vmatprep.subr.mxu0 0.0
        %620 = vmatpush1.xpose.msra.mxu0 0.0
        %621 = vmatprep.subr.mxu0 0.0
        %622 = vmatpush1.xpose.msra.mxu0 0.0
        %623 = vmatprep.subr.mxu0 0.0
        %624 = vmatpush1.xpose.msra.mxu0 0.0
        %625 = vmatprep.subr.mxu0 0.0
        %626 = vmatpush1.xpose.msra.mxu0 0.0
        %627 = vmatprep.subr.mxu0 0.0
        %628 = vmatpush1.xpose.msra.mxu0 0.0
        %629 = vmatprep.subr.mxu0 0.0
        %630 = vmatpush1.xpose.msra.mxu0 0.0
        %631 = vmatprep.subr.mxu0 0.0
        %632 = vmatpush1.xpose.msra.mxu0 0.0
        %633 = vmatprep.subr.mxu0 0.0
        %634 = vmatpush1.xpose.msra.mxu0 0.0
        %635 = vmatprep.mubr.f32.mxu0 0.0
        %636 = vmatmul.mubr.f32.gmra.mrb[0].mxu0 %v567
        %v637 = vpop.f32.mrb[0].mxu0
        %v638 = vadd.f32 0.0, %v637
        %v639 = vpop.f32.mrb[0].mxu0
        %640 = vdwg.mxu0
        %v641 = vsel %vm397, %v638, -inf
        %642 = vmax.xlane.f32.xlu0 %v641
        %v643 = vpop.xlane.xlu0 %642
        %v644 = vsub.f32 %v638, %v643
        %v645 = vmul.f32 %v644, 1.442695
        %v646 = vpow.pop %v645
        %v647 = vsel %vm397, %v646, 0.0
        %648 = vadd.xlane.f32.xlu0 %v647
        %v649 = vpop.xlane.xlu0 %648
        %v650 = vrcp.pop %v649
        %v651 = vmul.f32 1.0, %v650
        %v652 = vmul.f32 %v646, %v651
        %654 = vrot.lane.b32.xlu0 %v652, 8
        %v655 = vpop.permute.xlu0 %654
        %vm657 = vcmask 130112
        %658 = vst.msk [vmem:[%s306] sm:$0xff] %vm657, %v655
        %659 = vrot.lane.b32.xlu0 %v390, 56
        %v660 = vpop.permute.xlu0 %659
        %v662 = vsel %vm397, %v652, 0
        %664 = vmatprep.subr.mxu0 0.0
        %665 = vmatpush1.msra.mxu0 %v660
        %666 = vmatprep.subr.mxu0 0.0
        %667 = vmatpush1.msra.mxu0 0.0
        %668 = vmatprep.subr.mxu0 0.0
        %669 = vmatpush1.msra.mxu0 0.0
        %670 = vmatprep.subr.mxu0 0.0
        %671 = vmatpush1.msra.mxu0 0.0
        %672 = vmatprep.subr.mxu0 0.0
        %673 = vmatpush1.msra.mxu0 0.0
        %674 = vmatprep.subr.mxu0 0.0
        %675 = vmatpush1.msra.mxu0 0.0
        %676 = vmatprep.subr.mxu0 0.0
        %677 = vmatpush1.msra.mxu0 0.0
        %678 = vmatprep.subr.mxu0 0.0
        %679 = vmatpush1.msra.mxu0 0.0
        %680 = vmatprep.subr.mxu0 0.0
        %681 = vmatpush1.msra.mxu0 0.0
        %682 = vmatprep.subr.mxu0 0.0
        %683 = vmatpush1.msra.mxu0 0.0
        %684 = vmatprep.subr.mxu0 0.0
        %685 = vmatpush1.msra.mxu0 0.0
        %686 = vmatprep.subr.mxu0 0.0
        %687 = vmatpush1.msra.mxu0 0.0
        %688 = vmatprep.subr.mxu0 0.0
        %689 = vmatpush1.msra.mxu0 0.0
        %690 = vmatprep.subr.mxu0 0.0
        %691 = vmatpush1.msra.mxu0 0.0
        %692 = vmatprep.subr.mxu0 0.0
        %693 = vmatpush1.msra.mxu0 0.0
        %694 = vmatprep.subr.mxu0 0.0
        %695 = vmatpush1.msra.mxu0 0.0
        %696 = vmatprep.subr.mxu0 0.0
        %697 = vmatpush1.msra.mxu0 0.0
        %698 = vmatprep.subr.mxu0 0.0
        %699 = vmatpush1.msra.mxu0 0.0
        %700 = vmatprep.subr.mxu0 0.0
        %701 = vmatpush1.msra.mxu0 0.0
        %702 = vmatprep.subr.mxu0 0.0
        %703 = vmatpush1.msra.mxu0 0.0
        %704 = vmatprep.subr.mxu0 0.0
        %705 = vmatpush1.msra.mxu0 0.0
        %706 = vmatprep.subr.mxu0 0.0
        %707 = vmatpush1.msra.mxu0 0.0
        %708 = vmatprep.subr.mxu0 0.0
        %709 = vmatpush1.msra.mxu0 0.0
        %710 = vmatprep.subr.mxu0 0.0
        %711 = vmatpush1.msra.mxu0 0.0
        %712 = vmatprep.subr.mxu0 0.0
        %713 = vmatpush1.msra.mxu0 0.0
        %714 = vmatprep.subr.mxu0 0.0
        %715 = vmatpush1.msra.mxu0 0.0
        %716 = vmatprep.subr.mxu0 0.0
        %717 = vmatpush1.msra.mxu0 0.0
        %718 = vmatprep.subr.mxu0 0.0
        %719 = vmatpush1.msra.mxu0 0.0
        %720 = vmatprep.subr.mxu0 0.0
        %721 = vmatpush1.msra.mxu0 0.0
        %722 = vmatprep.subr.mxu0 0.0
        %723 = vmatpush1.msra.mxu0 0.0
        %724 = vmatprep.subr.mxu0 0.0
        %725 = vmatpush1.msra.mxu0 0.0
        %726 = vmatprep.subr.mxu0 0.0
        %727 = vmatpush1.msra.mxu0 0.0
        %728 = vmatprep.mubr.f32.mxu0 0.0
        %729 = vmatmul.mubr.f32.gmra.mrb[0].mxu0 %v662
        %v730 = vpop.f32.mrb[0].mxu0
        %v731 = vadd.f32 0.0, %v730
        %v732 = vpop.f32.mrb[0].mxu0
        %733 = vdwg.mxu0
        %735 = vrot.lane.b32.xlu0 %v731, 8
        %v736 = vpop.permute.xlu0 %735
        %738 = vst.msk [vmem:[#allocation2] sm:$0xff] %vm657, %v736
        %739 = vrot.lane.b32.xlu0 %v393, 112
        %v740 = vpop.permute.xlu0 %739
        %741 = vrot.lane.b32.xlu0 %v390, 80
        %v742 = vpop.permute.xlu0 %741
        %v743 = vsel %vm397, %v740, 0
        %v745 = vsel %vm397, %v742, 0
        %747 = vmatprep.subr.mxu0 0.0
        %748 = vmatpush1.xpose.msra.mxu0 %v745
        %749 = vmatprep.subr.mxu0 0.0
        %750 = vmatpush1.xpose.msra.mxu0 0.0
        %751 = vmatprep.subr.mxu0 0.0
        %752 = vmatpush1.xpose.msra.mxu0 0.0
        %753 = vmatprep.subr.mxu0 0.0
        %754 = vmatpush1.xpose.msra.mxu0 0.0
        %755 = vmatprep.subr.mxu0 0.0
        %756 = vmatpush1.xpose.msra.mxu0 0.0
        %757 = vmatprep.subr.mxu0 0.0
        %758 = vmatpush1.xpose.msra.mxu0 0.0
        %759 = vmatprep.subr.mxu0 0.0
        %760 = vmatpush1.xpose.msra.mxu0 0.0
        %761 = vmatprep.subr.mxu0 0.0
        %762 = vmatpush1.xpose.msra.mxu0 0.0
        %763 = vmatprep.subr.mxu0 0.0
        %764 = vmatpush1.xpose.msra.mxu0 0.0
        %765 = vmatprep.subr.mxu0 0.0
        %766 = vmatpush1.xpose.msra.mxu0 0.0
        %767 = vmatprep.subr.mxu0 0.0
        %768 = vmatpush1.xpose.msra.mxu0 0.0
        %769 = vmatprep.subr.mxu0 0.0
        %770 = vmatpush1.xpose.msra.mxu0 0.0
        %771 = vmatprep.subr.mxu0 0.0
        %772 = vmatpush1.xpose.msra.mxu0 0.0
        %773 = vmatprep.subr.mxu0 0.0
        %774 = vmatpush1.xpose.msra.mxu0 0.0
        %775 = vmatprep.subr.mxu0 0.0
        %776 = vmatpush1.xpose.msra.mxu0 0.0
        %777 = vmatprep.subr.mxu0 0.0
        %778 = vmatpush1.xpose.msra.mxu0 0.0
        %779 = vmatprep.subr.mxu0 0.0
        %780 = vmatpush1.xpose.msra.mxu0 0.0
        %781 = vmatprep.subr.mxu0 0.0
        %782 = vmatpush1.xpose.msra.mxu0 0.0
        %783 = vmatprep.subr.mxu0 0.0
        %784 = vmatpush1.xpose.msra.mxu0 0.0
        %785 = vmatprep.subr.mxu0 0.0
        %786 = vmatpush1.xpose.msra.mxu0 0.0
        %787 = vmatprep.subr.mxu0 0.0
        %788 = vmatpush1.xpose.msra.mxu0 0.0
        %789 = vmatprep.subr.mxu0 0.0
        %790 = vmatpush1.xpose.msra.mxu0 0.0
        %791 = vmatprep.subr.mxu0 0.0
        %792 = vmatpush1.xpose.msra.mxu0 0.0
        %793 = vmatprep.subr.mxu0 0.0
        %794 = vmatpush1.xpose.msra.mxu0 0.0
        %795 = vmatprep.subr.mxu0 0.0
        %796 = vmatpush1.xpose.msra.mxu0 0.0
        %797 = vmatprep.subr.mxu0 0.0
        %798 = vmatpush1.xpose.msra.mxu0 0.0
        %799 = vmatprep.subr.mxu0 0.0
        %800 = vmatpush1.xpose.msra.mxu0 0.0
        %801 = vmatprep.subr.mxu0 0.0
        %802 = vmatpush1.xpose.msra.mxu0 0.0
        %803 = vmatprep.subr.mxu0 0.0
        %804 = vmatpush1.xpose.msra.mxu0 0.0
        %805 = vmatprep.subr.mxu0 0.0
        %806 = vmatpush1.xpose.msra.mxu0 0.0
        %807 = vmatprep.subr.mxu0 0.0
        %808 = vmatpush1.xpose.msra.mxu0 0.0
        %809 = vmatprep.subr.mxu0 0.0
        %810 = vmatpush1.xpose.msra.mxu0 0.0
        %811 = vmatprep.mubr.f32.mxu0 0.0
        %812 = vmatmul.mubr.f32.gmra.mrb[0].mxu0 %v743
        %v813 = vpop.f32.mrb[0].mxu0
        %v814 = vadd.f32 0.0, %v813
        %v815 = vpop.f32.mrb[0].mxu0
        %816 = vdwg.mxu0
        %v817 = vsel %vm397, %v814, -inf
        %818 = vmax.xlane.f32.xlu0 %v817
        %v819 = vpop.xlane.xlu0 %818
        %v820 = vsub.f32 %v814, %v819
        %v821 = vmul.f32 %v820, 1.442695
        %v822 = vpow.pop %v821
        %v823 = vsel %vm397, %v822, 0.0
        %824 = vadd.xlane.f32.xlu0 %v823
        %v825 = vpop.xlane.xlu0 %824
        %v826 = vrcp.pop %v825
        %v827 = vmul.f32 1.0, %v826
        %v828 = vmul.f32 %v822, %v827
        %830 = vrot.lane.b32.xlu0 %v828, 16
        %v831 = vpop.permute.xlu0 %830
        %vm833 = vcmask 195712
        %834 = vst.msk [vmem:[%s306] sm:$0xff] %vm833, %v831
        %835 = vrot.lane.b32.xlu0 %v390, 48
        %v836 = vpop.permute.xlu0 %835
        %v838 = vsel %vm397, %v828, 0
        %840 = vmatprep.subr.mxu0 0.0
        %841 = vmatpush1.msra.mxu0 %v836
        %842 = vmatprep.subr.mxu0 0.0
        %843 = vmatpush1.msra.mxu0 0.0
        %844 = vmatprep.subr.mxu0 0.0
        %845 = vmatpush1.msra.mxu0 0.0
        %846 = vmatprep.subr.mxu0 0.0
        %847 = vmatpush1.msra.mxu0 0.0
        %848 = vmatprep.subr.mxu0 0.0
        %849 = vmatpush1.msra.mxu0 0.0
        %850 = vmatprep.subr.mxu0 0.0
        %851 = vmatpush1.msra.mxu0 0.0
        %852 = vmatprep.subr.mxu0 0.0
        %853 = vmatpush1.msra.mxu0 0.0
        %854 = vmatprep.subr.mxu0 0.0
        %855 = vmatpush1.msra.mxu0 0.0
        %856 = vmatprep.subr.mxu0 0.0
        %857 = vmatpush1.msra.mxu0 0.0
        %858 = vmatprep.subr.mxu0 0.0
        %859 = vmatpush1.msra.mxu0 0.0
        %860 = vmatprep.subr.mxu0 0.0
        %861 = vmatpush1.msra.mxu0 0.0
        %862 = vmatprep.subr.mxu0 0.0
        %863 = vmatpush1.msra.mxu0 0.0
        %864 = vmatprep.subr.mxu0 0.0
        %865 = vmatpush1.msra.mxu0 0.0
        %866 = vmatprep.subr.mxu0 0.0
        %867 = vmatpush1.msra.mxu0 0.0
        %868 = vmatprep.subr.mxu0 0.0
        %869 = vmatpush1.msra.mxu0 0.0
        %870 = vmatprep.subr.mxu0 0.0
        %871 = vmatpush1.msra.mxu0 0.0
        %872 = vmatprep.subr.mxu0 0.0
        %873 = vmatpush1.msra.mxu0 0.0
        %874 = vmatprep.subr.mxu0 0.0
        %875 = vmatpush1.msra.mxu0 0.0
        %876 = vmatprep.subr.mxu0 0.0
        %877 = vmatpush1.msra.mxu0 0.0
        %878 = vmatprep.subr.mxu0 0.0
        %879 = vmatpush1.msra.mxu0 0.0
        %880 = vmatprep.subr.mxu0 0.0
        %881 = vmatpush1.msra.mxu0 0.0
        %882 = vmatprep.subr.mxu0 0.0
        %883 = vmatpush1.msra.mxu0 0.0
        %884 = vmatprep.subr.mxu0 0.0
        %885 = vmatpush1.msra.mxu0 0.0
        %886 = vmatprep.subr.mxu0 0.0
        %887 = vmatpush1.msra.mxu0 0.0
        %888 = vmatprep.subr.mxu0 0.0
        %889 = vmatpush1.msra.mxu0 0.0
        %890 = vmatprep.subr.mxu0 0.0
        %891 = vmatpush1.msra.mxu0 0.0
        %892 = vmatprep.subr.mxu0 0.0
        %893 = vmatpush1.msra.mxu0 0.0
        %894 = vmatprep.subr.mxu0 0.0
        %895 = vmatpush1.msra.mxu0 0.0
        %896 = vmatprep.subr.mxu0 0.0
        %897 = vmatpush1.msra.mxu0 0.0
        %898 = vmatprep.subr.mxu0 0.0
        %899 = vmatpush1.msra.mxu0 0.0
        %900 = vmatprep.subr.mxu0 0.0
        %901 = vmatpush1.msra.mxu0 0.0
        %902 = vmatprep.subr.mxu0 0.0
        %903 = vmatpush1.msra.mxu0 0.0
        %904 = vmatprep.mubr.f32.mxu0 0.0
        %905 = vmatmul.mubr.f32.gmra.mrb[0].mxu0 %v838
        %v906 = vpop.f32.mrb[0].mxu0
        %v907 = vadd.f32 0.0, %v906
        %v908 = vpop.f32.mrb[0].mxu0
        %909 = vdwg.mxu0
        %911 = vrot.lane.b32.xlu0 %v907, 16
        %v912 = vpop.permute.xlu0 %911
        %914 = vst.msk [vmem:[#allocation2] sm:$0xff] %vm833, %v912
        %915 = vrot.lane.b32.xlu0 %v393, 104
        %v916 = vpop.permute.xlu0 %915
        %917 = vrot.lane.b32.xlu0 %v390, 72
        %v918 = vpop.permute.xlu0 %917
        %v919 = vsel %vm397, %v916, 0
        %v921 = vsel %vm397, %v918, 0
        %923 = vmatprep.subr.mxu0 0.0
        %924 = vmatpush1.xpose.msra.mxu0 %v921
        %925 = vmatprep.subr.mxu0 0.0
        %926 = vmatpush1.xpose.msra.mxu0 0.0
        %927 = vmatprep.subr.mxu0 0.0
        %928 = vmatpush1.xpose.msra.mxu0 0.0
        %929 = vmatprep.subr.mxu0 0.0
        %930 = vmatpush1.xpose.msra.mxu0 0.0
        %931 = vmatprep.subr.mxu0 0.0
        %932 = vmatpush1.xpose.msra.mxu0 0.0
        %933 = vmatprep.subr.mxu0 0.0
        %934 = vmatpush1.xpose.msra.mxu0 0.0
        %935 = vmatprep.subr.mxu0 0.0
        %936 = vmatpush1.xpose.msra.mxu0 0.0
        %937 = vmatprep.subr.mxu0 0.0
        %938 = vmatpush1.xpose.msra.mxu0 0.0
        %939 = vmatprep.subr.mxu0 0.0
        %940 = vmatpush1.xpose.msra.mxu0 0.0
        %941 = vmatprep.subr.mxu0 0.0
        %942 = vmatpush1.xpose.msra.mxu0 0.0
        %943 = vmatprep.subr.mxu0 0.0
        %944 = vmatpush1.xpose.msra.mxu0 0.0
        %945 = vmatprep.subr.mxu0 0.0
        %946 = vmatpush1.xpose.msra.mxu0 0.0
        %947 = vmatprep.subr.mxu0 0.0
        %948 = vmatpush1.xpose.msra.mxu0 0.0
        %949 = vmatprep.subr.mxu0 0.0
        %950 = vmatpush1.xpose.msra.mxu0 0.0
        %951 = vmatprep.subr.mxu0 0.0
        %952 = vmatpush1.xpose.msra.mxu0 0.0
        %953 = vmatprep.subr.mxu0 0.0
        %954 = vmatpush1.xpose.msra.mxu0 0.0
        %955 = vmatprep.subr.mxu0 0.0
        %956 = vmatpush1.xpose.msra.mxu0 0.0
        %957 = vmatprep.subr.mxu0 0.0
        %958 = vmatpush1.xpose.msra.mxu0 0.0
        %959 = vmatprep.subr.mxu0 0.0
        %960 = vmatpush1.xpose.msra.mxu0 0.0
        %961 = vmatprep.subr.mxu0 0.0
        %962 = vmatpush1.xpose.msra.mxu0 0.0
        %963 = vmatprep.subr.mxu0 0.0
        %964 = vmatpush1.xpose.msra.mxu0 0.0
        %965 = vmatprep.subr.mxu0 0.0
        %966 = vmatpush1.xpose.msra.mxu0 0.0
        %967 = vmatprep.subr.mxu0 0.0
        %968 = vmatpush1.xpose.msra.mxu0 0.0
        %969 = vmatprep.subr.mxu0 0.0
        %970 = vmatpush1.xpose.msra.mxu0 0.0
        %971 = vmatprep.subr.mxu0 0.0
        %972 = vmatpush1.xpose.msra.mxu0 0.0
        %973 = vmatprep.subr.mxu0 0.0
        %974 = vmatpush1.xpose.msra.mxu0 0.0
        %975 = vmatprep.subr.mxu0 0.0
        %976 = vmatpush1.xpose.msra.mxu0 0.0
        %977 = vmatprep.subr.mxu0 0.0
        %978 = vmatpush1.xpose.msra.mxu0 0.0
        %979 = vmatprep.subr.mxu0 0.0
        %980 = vmatpush1.xpose.msra.mxu0 0.0
        %981 = vmatprep.subr.mxu0 0.0
        %982 = vmatpush1.xpose.msra.mxu0 0.0
        %983 = vmatprep.subr.mxu0 0.0
        %984 = vmatpush1.xpose.msra.mxu0 0.0
        %985 = vmatprep.subr.mxu0 0.0
        %986 = vmatpush1.xpose.msra.mxu0 0.0
        %987 = vmatprep.mubr.f32.mxu0 0.0
        %988 = vmatmul.mubr.f32.gmra.mrb[0].mxu0 %v919
        %v989 = vpop.f32.mrb[0].mxu0
        %v990 = vadd.f32 0.0, %v989
        %v991 = vpop.f32.mrb[0].mxu0
        %992 = vdwg.mxu0
        %v993 = vsel %vm397, %v990, -inf
        %994 = vmax.xlane.f32.xlu0 %v993
        %v995 = vpop.xlane.xlu0 %994
        %v996 = vsub.f32 %v990, %v995
        %v997 = vmul.f32 %v996, 1.442695
        %v998 = vpow.pop %v997
        %v999 = vsel %vm397, %v998, 0.0
        %1000 = vadd.xlane.f32.xlu0 %v999
        %v1001 = vpop.xlane.xlu0 %1000
        %v1002 = vrcp.pop %v1001
        %v1003 = vmul.f32 1.0, %v1002
        %v1004 = vmul.f32 %v998, %v1003
        %1006 = vrot.lane.b32.xlu0 %v1004, 24
        %v1007 = vpop.permute.xlu0 %1006
        %vm1009 = vcmask 261312
        %1010 = vst.msk [vmem:[%s306] sm:$0xff] %vm1009, %v1007
        %1011 = vrot.lane.b32.xlu0 %v390, 40
        %v1012 = vpop.permute.xlu0 %1011
        %v1014 = vsel %vm397, %v1004, 0
        %1016 = vmatprep.subr.mxu0 0.0
        %1017 = vmatpush1.msra.mxu0 %v1012
        %1018 = vmatprep.subr.mxu0 0.0
        %1019 = vmatpush1.msra.mxu0 0.0
        %1020 = vmatprep.subr.mxu0 0.0
        %1021 = vmatpush1.msra.mxu0 0.0
        %1022 = vmatprep.subr.mxu0 0.0
        %1023 = vmatpush1.msra.mxu0 0.0
        %1024 = vmatprep.subr.mxu0 0.0
        %1025 = vmatpush1.msra.mxu0 0.0
        %1026 = vmatprep.subr.mxu0 0.0
        %1027 = vmatpush1.msra.mxu0 0.0
        %1028 = vmatprep.subr.mxu0 0.0
        %1029 = vmatpush1.msra.mxu0 0.0
        %1030 = vmatprep.subr.mxu0 0.0
        %1031 = vmatpush1.msra.mxu0 0.0
        %1032 = vmatprep.subr.mxu0 0.0
        %1033 = vmatpush1.msra.mxu0 0.0
        %1034 = vmatprep.subr.mxu0 0.0
        %1035 = vmatpush1.msra.mxu0 0.0
        %1036 = vmatprep.subr.mxu0 0.0
        %1037 = vmatpush1.msra.mxu0 0.0
        %1038 = vmatprep.subr.mxu0 0.0
        %1039 = vmatpush1.msra.mxu0 0.0
        %1040 = vmatprep.subr.mxu0 0.0
        %1041 = vmatpush1.msra.mxu0 0.0
        %1042 = vmatprep.subr.mxu0 0.0
        %1043 = vmatpush1.msra.mxu0 0.0
        %1044 = vmatprep.subr.mxu0 0.0
        %1045 = vmatpush1.msra.mxu0 0.0
        %1046 = vmatprep.subr.mxu0 0.0
        %1047 = vmatpush1.msra.mxu0 0.0
        %1048 = vmatprep.subr.mxu0 0.0
        %1049 = vmatpush1.msra.mxu0 0.0
        %1050 = vmatprep.subr.mxu0 0.0
        %1051 = vmatpush1.msra.mxu0 0.0
        %1052 = vmatprep.subr.mxu0 0.0
        %1053 = vmatpush1.msra.mxu0 0.0
        %1054 = vmatprep.subr.mxu0 0.0
        %1055 = vmatpush1.msra.mxu0 0.0
        %1056 = vmatprep.subr.mxu0 0.0
        %1057 = vmatpush1.msra.mxu0 0.0
        %1058 = vmatprep.subr.mxu0 0.0
        %1059 = vmatpush1.msra.mxu0 0.0
        %1060 = vmatprep.subr.mxu0 0.0
        %1061 = vmatpush1.msra.mxu0 0.0
        %1062 = vmatprep.subr.mxu0 0.0
        %1063 = vmatpush1.msra.mxu0 0.0
        %1064 = vmatprep.subr.mxu0 0.0
        %1065 = vmatpush1.msra.mxu0 0.0
        %1066 = vmatprep.subr.mxu0 0.0
        %1067 = vmatpush1.msra.mxu0 0.0
        %1068 = vmatprep.subr.mxu0 0.0
        %1069 = vmatpush1.msra.mxu0 0.0
        %1070 = vmatprep.subr.mxu0 0.0
        %1071 = vmatpush1.msra.mxu0 0.0
        %1072 = vmatprep.subr.mxu0 0.0
        %1073 = vmatpush1.msra.mxu0 0.0
        %1074 = vmatprep.subr.mxu0 0.0
        %1075 = vmatpush1.msra.mxu0 0.0
        %1076 = vmatprep.subr.mxu0 0.0
        %1077 = vmatpush1.msra.mxu0 0.0
        %1078 = vmatprep.subr.mxu0 0.0
        %1079 = vmatpush1.msra.mxu0 0.0
        %1080 = vmatprep.mubr.f32.mxu0 0.0
        %1081 = vmatmul.mubr.f32.gmra.mrb[0].mxu0 %v1014
        %v1082 = vpop.f32.mrb[0].mxu0
        %v1083 = vadd.f32 0.0, %v1082
        %v1084 = vpop.f32.mrb[0].mxu0
        %1085 = vdwg.mxu0
        %1087 = vrot.lane.b32.xlu0 %v1083, 24
        %v1088 = vpop.permute.xlu0 %1087
        %1090 = vst.msk [vmem:[#allocation2] sm:$0xff] %vm1009, %v1088
        %v1091 = vld [vmem:[#allocation2] sm:$0xff]
        %v1092 = vld [vmem:[#allocation8] sm:$0xff]
        %v1093 = vld [vmem:[#allocation8 + $0x8] sm:$0xff]
        %v1094 = vld [vmem:[#allocation8 + $0x10] sm:$0xff]
        %v1095 = vld [vmem:[#allocation8 + $0x18] sm:$0xff]
        %v1096 = vld [vmem:[%s4] sm:$0x1]
        %v1098 = vlaneseq
        %v1099 = vshrl.u32 %v1098, 7
        %v1100 = vsub.s32 0, %v1099
        %v1101 = vrot.slane %v1096, %v1100
        %v1104 = vsel %vm319, %v1091, 0
        %1106 = vmatprep.subr.mxu0 0.0
        %1107 = vmatpush1.msra.mxu0 %v1092
        %1108 = vmatprep.subr.mxu0 0.0
        %1109 = vmatpush1.msra.mxu0 %v1093
        %1110 = vmatprep.subr.mxu0 0.0
        %1111 = vmatpush1.msra.mxu0 %v1094
        %1112 = vmatprep.subr.mxu0 0.0
        %1113 = vmatpush1.msra.mxu0 %v1095
        %1114 = vmatprep.subr.mxu0 0.0
        %1115 = vmatpush1.msra.mxu0 0.0
        %1116 = vmatprep.subr.mxu0 0.0
        %1117 = vmatpush1.msra.mxu0 0.0
        %1118 = vmatprep.subr.mxu0 0.0
        %1119 = vmatpush1.msra.mxu0 0.0
        %1120 = vmatprep.subr.mxu0 0.0
        %1121 = vmatpush1.msra.mxu0 0.0
        %1122 = vmatprep.subr.mxu0 0.0
        %1123 = vmatpush1.msra.mxu0 0.0
        %1124 = vmatprep.subr.mxu0 0.0
        %1125 = vmatpush1.msra.mxu0 0.0
        %1126 = vmatprep.subr.mxu0 0.0
        %1127 = vmatpush1.msra.mxu0 0.0
        %1128 = vmatprep.subr.mxu0 0.0
        %1129 = vmatpush1.msra.mxu0 0.0
        %1130 = vmatprep.subr.mxu0 0.0
        %1131 = vmatpush1.msra.mxu0 0.0
        %1132 = vmatprep.subr.mxu0 0.0
        %1133 = vmatpush1.msra.mxu0 0.0
        %1134 = vmatprep.subr.mxu0 0.0
        %1135 = vmatpush1.msra.mxu0 0.0
        %1136 = vmatprep.subr.mxu0 0.0
        %1137 = vmatpush1.msra.mxu0 0.0
        %1138 = vmatprep.subr.mxu0 0.0
        %1139 = vmatpush1.msra.mxu0 0.0
        %1140 = vmatprep.subr.mxu0 0.0
        %1141 = vmatpush1.msra.mxu0 0.0
        %1142 = vmatprep.subr.mxu0 0.0
        %1143 = vmatpush1.msra.mxu0 0.0
        %1144 = vmatprep.subr.mxu0 0.0
        %1145 = vmatpush1.msra.mxu0 0.0
        %1146 = vmatprep.subr.mxu0 0.0
        %1147 = vmatpush1.msra.mxu0 0.0
        %1148 = vmatprep.subr.mxu0 0.0
        %1149 = vmatpush1.msra.mxu0 0.0
        %1150 = vmatprep.subr.mxu0 0.0
        %1151 = vmatpush1.msra.mxu0 0.0
        %1152 = vmatprep.subr.mxu0 0.0
        %1153 = vmatpush1.msra.mxu0 0.0
        %1154 = vmatprep.subr.mxu0 0.0
        %1155 = vmatpush1.msra.mxu0 0.0
        %1156 = vmatprep.subr.mxu0 0.0
        %1157 = vmatpush1.msra.mxu0 0.0
        %1158 = vmatprep.subr.mxu0 0.0
        %1159 = vmatpush1.msra.mxu0 0.0
        %1160 = vmatprep.subr.mxu0 0.0
        %1161 = vmatpush1.msra.mxu0 0.0
        %1162 = vmatprep.subr.mxu0 0.0
        %1163 = vmatpush1.msra.mxu0 0.0
        %1164 = vmatprep.subr.mxu0 0.0
        %1165 = vmatpush1.msra.mxu0 0.0
        %1166 = vmatprep.subr.mxu0 0.0
        %1167 = vmatpush1.msra.mxu0 0.0
        %1168 = vmatprep.subr.mxu0 0.0
        %1169 = vmatpush1.msra.mxu0 0.0
        %1170 = vmatprep.mubr.f32.mxu0 0.0
        %1171 = vmatmul.mubr.f32.gmra.mrb[0].mxu0 %v1104
        %v1172 = vpop.f32.mrb[0].mxu0
        %v1173 = vadd.f32 %v1101, %v1172
        %v1174 = vpop.f32.mrb[0].mxu0
        %1175 = vdwg.mxu0
        %1176 = vst.msk [vmem:[%s299] sm:$0xff] %vm319, %v1173
        %s1177 = sand.u32 %s146, 1
        %s1178 = scalar_lea.sflag [#allocation5], %s1177
        %s1179 = sand.u32 %s146, 1
        %s1180 = smul.addr %s1179, 8
        %s1181 = scalar_lea.vmem [#allocation9], %s1180
        %s1182 = sand.u32 %s172, 1
        %s1183 = scalar_lea.sflag [#allocation11], %s1182
        %s1184 = sand.u32 %s172, 1
        %s1185 = smul.addr %s1184, 8
        %s1186 = scalar_lea.vmem [#allocation10], %s1185
        // Predicated region
        $region53: #{tpu_custom_call.1} parent=39 // pred_check
          %p1187 = pneg %p156
        $region54: #{tpu_custom_call.1} parent=39 // pred_check_branch
          %1189 = sbr.rel (%p1187) target = $region56
        $region55: #{tpu_custom_call.1} parent=39 // pred_region
          %s1191 = ssub.s32 128, 128
          %1192 = vsyncadd %s1178, %s1191
          %s1193 = smul.addr %s28, 128
          %s1194 = scalar_lea.hbm %s5, %s1193
          %s1196 = sshll.u32 %s1181, 4
          %s1197 = int_to_ptr.vmem [resolvable:$true] %s1196
          %1199 = dma.vmem_to_hbm [thread:$0]  %s1197, 128, %s1194, %s1178
        $region56: #{tpu_custom_call.1} parent=39 // pred_fallthru
          _
        // Predicated region
        $region57: #{tpu_custom_call.1} parent=39 // pred_check
          %p1200 = pneg %p182
        $region58: #{tpu_custom_call.1} parent=39 // pred_check_branch
          %1202 = sbr.rel (%p1200) target = $region60
        $region59: #{tpu_custom_call.1} parent=39 // pred_region
          %s1204 = ssub.s32 128, 128
          %1205 = vsyncadd %s1183, %s1204
          %s1206 = smul.addr %s28, 128
          %s1207 = scalar_lea.hbm %s6, %s1206
          %s1209 = sshll.u32 %s1186, 4
          %s1210 = int_to_ptr.vmem [resolvable:$true] %s1209
          %1212 = dma.vmem_to_hbm [thread:$0]  %s1210, 128, %s1207, %s1183
        $region60: #{tpu_custom_call.1} parent=39 // pred_fallthru
          _
      $region40: #{tpu_custom_call.1} parent=5 // pred_fallthru
        _
      %p1213 = scmp.le.s32.totalorder 2, %s23
      // Predicated region
      $region61: #{tpu_custom_call.1} parent=5 // pred_check
        %p1214 = pneg %p1213
      $region62: #{tpu_custom_call.1} parent=5 // pred_check_branch
        %1216 = sbr.rel (%p1214) target = $region64
      $region63: #{tpu_custom_call.1} parent=5 // pred_region
        %s1217 = ssub.s32 %s23, 2
        // Predicated region
        $region65: #{tpu_custom_call.1} parent=63 // pred_check
          %p1218 = pneg %p162
        $region66: #{tpu_custom_call.1} parent=63 // pred_check_branch
          %1220 = sbr.rel (%p1218) target = $region68
        $region67: #{tpu_custom_call.1} parent=63 // pred_region
          %s1221 = sand.u32 %s147, 1
          %s1222 = scalar_lea.sflag [#allocation5], %s1221
          %s1223 = sand.u32 %s147, 1
          %s1224 = smul.addr %s1223, 8
          %s1225 = scalar_lea.vmem [#allocation9], %s1224
          %1226 = dma.done %s1222, 128
        $region68: #{tpu_custom_call.1} parent=63 // pred_fallthru
          _
        // Predicated region
        $region69: #{tpu_custom_call.1} parent=63 // pred_check
          %p1227 = pneg %p188
        $region70: #{tpu_custom_call.1} parent=63 // pred_check_branch
          %1229 = sbr.rel (%p1227) target = $region72
        $region71: #{tpu_custom_call.1} parent=63 // pred_region
          %s1230 = sand.u32 %s173, 1
          %s1231 = scalar_lea.sflag [#allocation11], %s1230
          %s1232 = sand.u32 %s173, 1
          %s1233 = smul.addr %s1232, 8
          %s1234 = scalar_lea.vmem [#allocation10], %s1233
          %1235 = dma.done %s1231, 128
        $region72: #{tpu_custom_call.1} parent=63 // pred_fallthru
          _
      $region64: #{tpu_custom_call.1} parent=5 // pred_fallthru
        _
    $region6: #{tpu_custom_call.1} parent=1 // loop_footer
      %s27 = sadd.s32 1, %s23
    $region7: #{tpu_custom_call.1} parent=1 // loop_footer_branch
      %22 = sbr.rel target = $region3
    $region8: #{tpu_custom_call.1} parent=1 // loop_exit
      _
    %1236 = vsyncpa [#allocation4], 1
    %s1237 = scalar_lea.sflag [#allocation4], 1
    %1238 = vsyncpa %s1237, 1
    %1239 = vsyncpa [#allocation7], 1
    %1240 = vsyncpa [#allocation5], 1
    %s1241 = scalar_lea.sflag [#allocation5], 1
    %1242 = vsyncpa %s1241, 1
    %1243 = vsyncpa [#allocation11], 1
    %s1244 = scalar_lea.sflag [#allocation11], 1
    %1245 = vsyncpa %s1244, 1

</llo_original>
